<compile_context>
chip_gen: v7x
topology: tpu7x:2x2x1
jax: 0.10.0
libtpu: 0.0.40
codegen_flags: <defaults>
</compile_context>

<pallas_src>
import math

import jax
import jax.numpy as jnp
from jax import lax
from jax.experimental import pallas as pl
from jax.experimental.pallas import tpu as pltpu


def _history_encoder_kernel(x_ref, keep_ref, wi_ref, wh_ref, b_ref,
                            h0_ref, c0_ref,
                            h_seq_ref, hx_out_ref, cx_out_ref):
    """Fused T-step LSTMCell recurrence with NO_OP masking.

    Refs (whole arrays, VMEM resident):
      x_ref:     (T, B, A)  prev_action per step
      keep_ref:  (T, B, 1)  f32 mask, nonzero == NO_OP (keep old state)
      wi_ref:    (A, 4H)    W_ih^T, gate order (i, f, o, g)
      wh_ref:    (H, 4H)    W_hh^T, gate order (i, f, o, g)
      b_ref:     (1, 4H)    b_ih + b_hh, same gate order
      h0_ref:    (B, H)     initial hidden state
      c0_ref:    (B, H)     initial cell state
      h_seq_ref: (T, B, H)  per-step output hx (forward() return value)
      hx_out_ref/cx_out_ref: (B, H) final states
    """
    T = x_ref.shape[0]
    H = h0_ref.shape[1]

    wi = wi_ref[...]            # (A, 4H) -- loaded once, reused every step
    wh = wh_ref[...]            # (H, 4H)
    b = b_ref[...]              # (1, 4H)

    def step(t, carry):
        hx, cx = carry
        x = x_ref[t]            # (B, A)

        # Two resident-weight MXU dots (no per-step concat / relayout).
        gates = (jnp.dot(x, wi, preferred_element_type=jnp.float32)
                 + jnp.dot(hx, wh, preferred_element_type=jnp.float32)
                 + b)           # (B, 4H), gate order (i, f, o, g)

        sig = jax.nn.sigmoid(gates[:, 0:3 * H])     # only the 3 sigmoid gates
        i_g = sig[:, 0:H]
        f_g = sig[:, H:2 * H]
        o_g = sig[:, 2 * H:3 * H]
        g_g = jnp.tanh(gates[:, 3 * H:4 * H])       # only the tanh gate

        c_new = f_g * cx + i_g * g_g
        h_new = o_g * jnp.tanh(c_new)

        # torch.where(mask, old, new): nonzero keep == NO_OP keeps old state.
        keep = keep_ref[t] != 0.0                   # (B, 1) bool
        hx_n = jnp.where(keep, hx, h_new)
        cx_n = jnp.where(keep, cx, c_new)

        h_seq_ref[t] = hx_n                         # resident (T,B,H) slab
        return hx_n, cx_n

    hx, cx = lax.fori_loop(0, T, step, (h0_ref[...], c0_ref[...]), unroll=True)

    hx_out_ref[...] = hx
    cx_out_ref[...] = cx


def prepare_lstm_params(w_ih, w_hh, b_ih, b_hh):
    """Once-per-parameter-set preprocessing (hoisted out of the kernel).

    Args (PyTorch LSTMCell layout, gate order (i, f, g, o)):
      w_ih: (4H, A), w_hh: (4H, H), b_ih/b_hh: (4H,)
    Returns (gate order permuted to (i, f, o, g)):
      Wi: (A, 4H) = W_ih^T,  Wh: (H, 4H) = W_hh^T,  b: (1, 4H) = b_ih + b_hh
    """
    H = w_hh.shape[1]
    perm = jnp.concatenate([jnp.arange(0, 2 * H),          # i, f
                            jnp.arange(3 * H, 4 * H),      # o
                            jnp.arange(2 * H, 3 * H)])     # g
    Wi = jnp.transpose(w_ih[perm])
    Wh = jnp.transpose(w_hh[perm])
    b = (b_ih + b_hh)[perm].reshape(1, -1)
    return Wi, Wh, b


def history_encoder_forward_seq(prev_actions, masks, hx0, cx0, Wi, Wh, b):
    """Fused T-step HistoryEncoder forward (one pallas_call for the rollout).

    Equivalent to calling the PyTorch module's forward() T times in sequence
    (with set_hiddenx-style initial state hx0/cx0).

    Args:
      prev_actions: (T, B, A) f32
      masks:        (T, B) or (T, B, 1) bool/int, True == NO_OP (keep state)
      hx0, cx0:     (B, H) f32 initial states
      Wi, Wh, b:    from prepare_lstm_params
    Returns:
      h_seq: (T, B, H) f32  -- hx returned by forward() at each step
      hx:    (B, H) f32     -- final hidden state
      cx:    (B, H) f32     -- final cell state
    """
    T, B, A = prev_actions.shape
    H = hx0.shape[1]

    if T == 0:  # degenerate rollout: nothing to encode
        return jnp.zeros((0, B, H), jnp.float32), hx0, cx0

    keep = masks.astype(jnp.float32).reshape(T, B, 1)

    flops = 2 * T * B * (A + H) * 4 * H
    transcendentals = T * B * 5 * H                     # 3H sigm + H tanh + H tanh(c)
    bytes_accessed = 4 * (prev_actions.size + keep.size + Wi.size + Wh.size
                          + b.size + hx0.size + cx0.size + T * B * H + 2 * B * H)

    vmem = pl.BlockSpec(memory_space=pltpu.MemorySpace.VMEM)

    h_seq, hx, cx = pl.pallas_call(
        _history_encoder_kernel,
        out_shape=(jax.ShapeDtypeStruct((T, B, H), jnp.float32),
                   jax.ShapeDtypeStruct((B, H), jnp.float32),
                   jax.ShapeDtypeStruct((B, H), jnp.float32)),
        in_specs=[vmem] * 7,
        out_specs=(vmem, vmem, vmem),
        cost_estimate=pl.CostEstimate(flops=flops,
                                      transcendentals=transcendentals,
                                      bytes_accessed=bytes_accessed),
    )(prev_actions, keep, Wi, Wh, b, hx0, cx0)

    return h_seq, hx, cx


def history_encoder_forward(prev_action, mask, hx, cx, Wi, Wh, b):
    """Single-step forward (T=1), matching HistoryEncoder.forward exactly."""
    h_seq, hx_new, cx_new = history_encoder_forward_seq(
        prev_action[None], mask.reshape(1, -1), hx, cx, Wi, Wh, b)
    return h_seq[0], hx_new, cx_new


def _reference_seq(prev_actions, masks, hx, cx, w_ih, w_hh, b_ih, b_hh):
    """Pure-JAX reference: torch.nn.LSTMCell + NO_OP mask, stepped T times."""
    H = hx.shape[1]
    hs = []
    for t in range(prev_actions.shape[0]):
        gates = prev_actions[t] @ w_ih.T + b_ih + hx @ w_hh.T + b_hh
        i = jax.nn.sigmoid(gates[:, 0:H])
        f = jax.nn.sigmoid(gates[:, H:2 * H])
        g = jnp.tanh(gates[:, 2 * H:3 * H])
        o = jax.nn.sigmoid(gates[:, 3 * H:4 * H])
        c_new = f * cx + i * g
        h_new = o * jnp.tanh(c_new)
        m = masks[t].reshape(-1, 1)
        hx = jnp.where(m, hx, h_new)
        cx = jnp.where(m, cx, c_new)
        hs.append(hx)
    return jnp.stack(hs), hx, cx


if __name__ == "__main__":
    # config = {'action_dim': 32, 'state_dim': 32}; small rollout of T=8 steps.
    B, A, H, T = 2, 32, 32, 8

    key = jax.random.PRNGKey(0)
    k_act, k_wih, k_whh, k_bih, k_bhh, k_mask = jax.random.split(key, 6)

    # PyTorch LSTMCell init: U(-1/sqrt(H), 1/sqrt(H)).
    bound = 1.0 / math.sqrt(H)
    w_ih = jax.random.uniform(k_wih, (4 * H, A), jnp.float32, -bound, bound)
    w_hh = jax.random.uniform(k_whh, (4 * H, H), jnp.float32, -bound, bound)
    b_ih = jax.random.uniform(k_bih, (4 * H,), jnp.float32, -bound, bound)
    b_hh = jax.random.uniform(k_bhh, (4 * H,), jnp.float32, -bound, bound)

    prev_actions = jax.random.normal(k_act, (T, B, A), jnp.float32)
    masks = jax.random.bernoulli(k_mask, 0.3, (T, B))      # True == NO_OP

    # set_hiddenx: initialize recurrent state to zeros.
    hx0 = jnp.zeros((B, H), jnp.float32)
    cx0 = jnp.zeros((B, H), jnp.float32)

    # Hoisted parameter prep (transpose + bias sum + gate reorder), done once.
    Wi, Wh, b = prepare_lstm_params(w_ih, w_hh, b_ih, b_hh)

    h_seq, hx_new, cx_new = history_encoder_forward_seq(
        prev_actions, masks, hx0, cx0, Wi, Wh, b)
    jax.block_until_ready((h_seq, hx_new, cx_new))

    h_seq_ref, hx_ref, cx_ref = _reference_seq(
        prev_actions, masks, hx0, cx0, w_ih, w_hh, b_ih, b_hh)

    assert jnp.allclose(h_seq, h_seq_ref, atol=1e-5, rtol=1e-5)
    assert jnp.allclose(hx_new, hx_ref, atol=1e-5, rtol=1e-5)
    assert jnp.allclose(cx_new, cx_ref, atol=1e-5, rtol=1e-5)

    # Also exercise the exact single-step forward() semantics.
    h1, hx1, cx1 = history_encoder_forward(
        prev_actions[0], masks[0], hx0, cx0, Wi, Wh, b)
    jax.block_until_ready((h1, hx1, cx1))
    assert jnp.allclose(h1, h_seq_ref[0], atol=1e-5, rtol=1e-5)
    assert jnp.allclose(hx1, h_seq_ref[0], atol=1e-5, rtol=1e-5)

    print("KERNEL_OK")
</pallas_src>

<mosaic_0001>
module attributes {stable_mosaic.version = 11 : i64} {
  func.func @_history_encoder_kernel(%arg0: memref<8x2x32xf32, #tpu.memory_space<vmem>>, %arg1: memref<8x2x1xf32, #tpu.memory_space<vmem>>, %arg2: memref<32x128xf32, #tpu.memory_space<vmem>>, %arg3: memref<32x128xf32, #tpu.memory_space<vmem>>, %arg4: memref<1x128xf32, #tpu.memory_space<vmem>>, %arg5: memref<2x32xf32, #tpu.memory_space<vmem>>, %arg6: memref<2x32xf32, #tpu.memory_space<vmem>>, %arg7: memref<8x2x32xf32, #tpu.memory_space<vmem>>, %arg8: memref<2x32xf32, #tpu.memory_space<vmem>>, %arg9: memref<2x32xf32, #tpu.memory_space<vmem>>) attributes {dimension_semantics = [], scalar_prefetch = 0 : i64, scratch_operands = 0 : i64, tpu.core_type = #tpu.core_type<tc>} {
    %c0 = arith.constant 0 : index
    %c0_0 = arith.constant 0 : index
    %0 = vector.load %arg2[%c0, %c0_0] : memref<32x128xf32, #tpu.memory_space<vmem>>, vector<32x128xf32>
    %c0_1 = arith.constant 0 : index
    %c0_2 = arith.constant 0 : index
    %1 = vector.load %arg3[%c0_1, %c0_2] : memref<32x128xf32, #tpu.memory_space<vmem>>, vector<32x128xf32>
    %c0_3 = arith.constant 0 : index
    %c0_4 = arith.constant 0 : index
    %2 = vector.load %arg4[%c0_3, %c0_4] : memref<1x128xf32, #tpu.memory_space<vmem>>, vector<1x128xf32>
    %c0_5 = arith.constant 0 : index
    %c0_6 = arith.constant 0 : index
    %3 = vector.load %arg5[%c0_5, %c0_6] : memref<2x32xf32, #tpu.memory_space<vmem>>, vector<2x32xf32>
    %c0_7 = arith.constant 0 : index
    %c0_8 = arith.constant 0 : index
    %4 = vector.load %arg6[%c0_7, %c0_8] : memref<2x32xf32, #tpu.memory_space<vmem>>, vector<2x32xf32>
    %c0_i32 = arith.constant 0 : i32
    %5 = arith.index_cast %c0_i32 : i32 to index
    %c0_9 = arith.constant 0 : index
    %c0_10 = arith.constant 0 : index
    %6 = vector.load %arg0[%5, %c0_9, %c0_10] : memref<8x2x32xf32, #tpu.memory_space<vmem>>, vector<1x2x32xf32>
    %7 = vector.shape_cast %6 : vector<1x2x32xf32> to vector<2x32xf32>
    %cst = arith.constant dense<0.000000e+00> : vector<2x128xf32>
    %8 = tpu.matmul %7, %0, %cst {dimension_numbers = #tpu.dot_dimension_numbers<[1], [0], [0], [1], [0, 0, 1, 1], [], []>} : vector<2x32xf32>, vector<32x128xf32>, vector<2x128xf32> -> vector<2x128xf32>
    %cst_11 = arith.constant dense<0.000000e+00> : vector<2x128xf32>
    %9 = tpu.matmul %3, %1, %cst_11 {dimension_numbers = #tpu.dot_dimension_numbers<[1], [0], [0], [1], [0, 0, 1, 1], [], []>} : vector<2x32xf32>, vector<32x128xf32>, vector<2x128xf32> -> vector<2x128xf32>
    %10 = arith.addf %8, %9 : vector<2x128xf32>
    %11 = vector.broadcast %2 : vector<1x128xf32> to vector<2x128xf32>
    %12 = arith.addf %10, %11 : vector<2x128xf32>
    %13 = vector.extract_strided_slice %12 {offsets = [0, 0], sizes = [2, 96], strides = [1, 1]} : vector<2x128xf32> to vector<2x96xf32>
    %14 = arith.negf %13 : vector<2x96xf32>
    %15 = math.exp %14 : vector<2x96xf32>
    %cst_12 = arith.constant 1.000000e+00 : f32
    %16 = vector.broadcast %cst_12 : f32 to vector<2x96xf32>
    %17 = arith.addf %16, %15 : vector<2x96xf32>
    %18 = arith.divf %16, %17 : vector<2x96xf32>
    %19 = vector.extract_strided_slice %18 {offsets = [0, 0], sizes = [2, 32], strides = [1, 1]} : vector<2x96xf32> to vector<2x32xf32>
    %20 = vector.extract_strided_slice %18 {offsets = [0, 32], sizes = [2, 32], strides = [1, 1]} : vector<2x96xf32> to vector<2x32xf32>
    %21 = vector.extract_strided_slice %18 {offsets = [0, 64], sizes = [2, 32], strides = [1, 1]} : vector<2x96xf32> to vector<2x32xf32>
    %22 = vector.extract_strided_slice %12 {offsets = [0, 96], sizes = [2, 32], strides = [1, 1]} : vector<2x128xf32> to vector<2x32xf32>
    %23 = math.tanh %22 : vector<2x32xf32>
    %24 = arith.mulf %20, %4 : vector<2x32xf32>
    %25 = arith.mulf %19, %23 : vector<2x32xf32>
    %26 = arith.addf %24, %25 : vector<2x32xf32>
    %27 = math.tanh %26 : vector<2x32xf32>
    %28 = arith.mulf %21, %27 : vector<2x32xf32>
    %29 = arith.index_cast %c0_i32 : i32 to index
    %c0_13 = arith.constant 0 : index
    %c0_14 = arith.constant 0 : index
    %30 = vector.load %arg1[%29, %c0_13, %c0_14] : memref<8x2x1xf32, #tpu.memory_space<vmem>>, vector<1x2x1xf32>
    %31 = vector.shape_cast %30 : vector<1x2x1xf32> to vector<2x1xf32>
    %cst_15 = arith.constant 0.000000e+00 : f32
    %32 = vector.broadcast %cst_15 : f32 to vector<2x1xf32>
    %33 = arith.cmpf one, %31, %32 : vector<2x1xf32>
    %34 = vector.shape_cast %33 : vector<2x1xi1> to vector<2x1xi1>
    %35 = vector.broadcast %34 : vector<2x1xi1> to vector<2x32xi1>
    %36 = arith.select %35, %3, %28 : vector<2x32xi1>, vector<2x32xf32>
    %37 = vector.shape_cast %33 : vector<2x1xi1> to vector<2x1xi1>
    %38 = vector.broadcast %37 : vector<2x1xi1> to vector<2x32xi1>
    %39 = arith.select %38, %4, %26 : vector<2x32xi1>, vector<2x32xf32>
    %40 = arith.index_cast %c0_i32 : i32 to index
    %c0_16 = arith.constant 0 : index
    %c0_17 = arith.constant 0 : index
    %41 = vector.load %arg7[%40, %c0_16, %c0_17] : memref<8x2x32xf32, #tpu.memory_space<vmem>>, vector<1x2x32xf32>
    %42 = vector.shape_cast %41 : vector<1x2x32xf32> to vector<2x32xf32>
    %43 = vector.shape_cast %36 : vector<2x32xf32> to vector<1x2x32xf32>
    tpu.vector_store %arg7[%40, %c0_16, %c0_17], %43 {strides = array<i32>} : memref<8x2x32xf32, #tpu.memory_space<vmem>>, vector<1x2x32xf32>,
    %c1_i32 = arith.constant 1 : i32
    %44 = arith.index_cast %c1_i32 : i32 to index
    %c0_18 = arith.constant 0 : index
    %c0_19 = arith.constant 0 : index
    %45 = vector.load %arg0[%44, %c0_18, %c0_19] : memref<8x2x32xf32, #tpu.memory_space<vmem>>, vector<1x2x32xf32>
    %46 = vector.shape_cast %45 : vector<1x2x32xf32> to vector<2x32xf32>
    %cst_20 = arith.constant dense<0.000000e+00> : vector<2x128xf32>
    %47 = tpu.matmul %46, %0, %cst_20 {dimension_numbers = #tpu.dot_dimension_numbers<[1], [0], [0], [1], [0, 0, 1, 1], [], []>} : vector<2x32xf32>, vector<32x128xf32>, vector<2x128xf32> -> vector<2x128xf32>
    %cst_21 = arith.constant dense<0.000000e+00> : vector<2x128xf32>
    %48 = tpu.matmul %36, %1, %cst_21 {dimension_numbers = #tpu.dot_dimension_numbers<[1], [0], [0], [1], [0, 0, 1, 1], [], []>} : vector<2x32xf32>, vector<32x128xf32>, vector<2x128xf32> -> vector<2x128xf32>
    %49 = arith.addf %47, %48 : vector<2x128xf32>
    %50 = vector.broadcast %2 : vector<1x128xf32> to vector<2x128xf32>
    %51 = arith.addf %49, %50 : vector<2x128xf32>
    %52 = vector.extract_strided_slice %51 {offsets = [0, 0], sizes = [2, 96], strides = [1, 1]} : vector<2x128xf32> to vector<2x96xf32>
    %53 = arith.negf %52 : vector<2x96xf32>
    %54 = math.exp %53 : vector<2x96xf32>
    %cst_22 = arith.constant 1.000000e+00 : f32
    %55 = vector.broadcast %cst_22 : f32 to vector<2x96xf32>
    %56 = arith.addf %55, %54 : vector<2x96xf32>
    %57 = arith.divf %55, %56 : vector<2x96xf32>
    %58 = vector.extract_strided_slice %57 {offsets = [0, 0], sizes = [2, 32], strides = [1, 1]} : vector<2x96xf32> to vector<2x32xf32>
    %59 = vector.extract_strided_slice %57 {offsets = [0, 32], sizes = [2, 32], strides = [1, 1]} : vector<2x96xf32> to vector<2x32xf32>
    %60 = vector.extract_strided_slice %57 {offsets = [0, 64], sizes = [2, 32], strides = [1, 1]} : vector<2x96xf32> to vector<2x32xf32>
    %61 = vector.extract_strided_slice %51 {offsets = [0, 96], sizes = [2, 32], strides = [1, 1]} : vector<2x128xf32> to vector<2x32xf32>
    %62 = math.tanh %61 : vector<2x32xf32>
    %63 = arith.mulf %59, %39 : vector<2x32xf32>
    %64 = arith.mulf %58, %62 : vector<2x32xf32>
    %65 = arith.addf %63, %64 : vector<2x32xf32>
    %66 = math.tanh %65 : vector<2x32xf32>
    %67 = arith.mulf %60, %66 : vector<2x32xf32>
    %68 = arith.index_cast %c1_i32 : i32 to index
    %c0_23 = arith.constant 0 : index
    %c0_24 = arith.constant 0 : index
    %69 = vector.load %arg1[%68, %c0_23, %c0_24] : memref<8x2x1xf32, #tpu.memory_space<vmem>>, vector<1x2x1xf32>
    %70 = vector.shape_cast %69 : vector<1x2x1xf32> to vector<2x1xf32>
    %cst_25 = arith.constant 0.000000e+00 : f32
    %71 = vector.broadcast %cst_25 : f32 to vector<2x1xf32>
    %72 = arith.cmpf one, %70, %71 : vector<2x1xf32>
    %73 = vector.shape_cast %72 : vector<2x1xi1> to vector<2x1xi1>
    %74 = vector.broadcast %73 : vector<2x1xi1> to vector<2x32xi1>
    %75 = arith.select %74, %36, %67 : vector<2x32xi1>, vector<2x32xf32>
    %76 = vector.shape_cast %72 : vector<2x1xi1> to vector<2x1xi1>
    %77 = vector.broadcast %76 : vector<2x1xi1> to vector<2x32xi1>
    %78 = arith.select %77, %39, %65 : vector<2x32xi1>, vector<2x32xf32>
    %79 = arith.index_cast %c1_i32 : i32 to index
    %c0_26 = arith.constant 0 : index
    %c0_27 = arith.constant 0 : index
    %80 = vector.load %arg7[%79, %c0_26, %c0_27] : memref<8x2x32xf32, #tpu.memory_space<vmem>>, vector<1x2x32xf32>
    %81 = vector.shape_cast %80 : vector<1x2x32xf32> to vector<2x32xf32>
    %82 = vector.shape_cast %75 : vector<2x32xf32> to vector<1x2x32xf32>
    tpu.vector_store %arg7[%79, %c0_26, %c0_27], %82 {strides = array<i32>} : memref<8x2x32xf32, #tpu.memory_space<vmem>>, vector<1x2x32xf32>,
    %c2_i32 = arith.constant 2 : i32
    %83 = arith.index_cast %c2_i32 : i32 to index
    %c0_28 = arith.constant 0 : index
    %c0_29 = arith.constant 0 : index
    %84 = vector.load %arg0[%83, %c0_28, %c0_29] : memref<8x2x32xf32, #tpu.memory_space<vmem>>, vector<1x2x32xf32>
    %85 = vector.shape_cast %84 : vector<1x2x32xf32> to vector<2x32xf32>
    %cst_30 = arith.constant dense<0.000000e+00> : vector<2x128xf32>
    %86 = tpu.matmul %85, %0, %cst_30 {dimension_numbers = #tpu.dot_dimension_numbers<[1], [0], [0], [1], [0, 0, 1, 1], [], []>} : vector<2x32xf32>, vector<32x128xf32>, vector<2x128xf32> -> vector<2x128xf32>
    %cst_31 = arith.constant dense<0.000000e+00> : vector<2x128xf32>
    %87 = tpu.matmul %75, %1, %cst_31 {dimension_numbers = #tpu.dot_dimension_numbers<[1], [0], [0], [1], [0, 0, 1, 1], [], []>} : vector<2x32xf32>, vector<32x128xf32>, vector<2x128xf32> -> vector<2x128xf32>
    %88 = arith.addf %86, %87 : vector<2x128xf32>
    %89 = vector.broadcast %2 : vector<1x128xf32> to vector<2x128xf32>
    %90 = arith.addf %88, %89 : vector<2x128xf32>
    %91 = vector.extract_strided_slice %90 {offsets = [0, 0], sizes = [2, 96], strides = [1, 1]} : vector<2x128xf32> to vector<2x96xf32>
    %92 = arith.negf %91 : vector<2x96xf32>
    %93 = math.exp %92 : vector<2x96xf32>
    %cst_32 = arith.constant 1.000000e+00 : f32
    %94 = vector.broadcast %cst_32 : f32 to vector<2x96xf32>
    %95 = arith.addf %94, %93 : vector<2x96xf32>
    %96 = arith.divf %94, %95 : vector<2x96xf32>
    %97 = vector.extract_strided_slice %96 {offsets = [0, 0], sizes = [2, 32], strides = [1, 1]} : vector<2x96xf32> to vector<2x32xf32>
    %98 = vector.extract_strided_slice %96 {offsets = [0, 32], sizes = [2, 32], strides = [1, 1]} : vector<2x96xf32> to vector<2x32xf32>
    %99 = vector.extract_strided_slice %96 {offsets = [0, 64], sizes = [2, 32], strides = [1, 1]} : vector<2x96xf32> to vector<2x32xf32>
    %100 = vector.extract_strided_slice %90 {offsets = [0, 96], sizes = [2, 32], strides = [1, 1]} : vector<2x128xf32> to vector<2x32xf32>
    %101 = math.tanh %100 : vector<2x32xf32>
    %102 = arith.mulf %98, %78 : vector<2x32xf32>
    %103 = arith.mulf %97, %101 : vector<2x32xf32>
    %104 = arith.addf %102, %103 : vector<2x32xf32>
    %105 = math.tanh %104 : vector<2x32xf32>
    %106 = arith.mulf %99, %105 : vector<2x32xf32>
    %107 = arith.index_cast %c2_i32 : i32 to index
    %c0_33 = arith.constant 0 : index
    %c0_34 = arith.constant 0 : index
    %108 = vector.load %arg1[%107, %c0_33, %c0_34] : memref<8x2x1xf32, #tpu.memory_space<vmem>>, vector<1x2x1xf32>
    %109 = vector.shape_cast %108 : vector<1x2x1xf32> to vector<2x1xf32>
    %cst_35 = arith.constant 0.000000e+00 : f32
    %110 = vector.broadcast %cst_35 : f32 to vector<2x1xf32>
    %111 = arith.cmpf one, %109, %110 : vector<2x1xf32>
    %112 = vector.shape_cast %111 : vector<2x1xi1> to vector<2x1xi1>
    %113 = vector.broadcast %112 : vector<2x1xi1> to vector<2x32xi1>
    %114 = arith.select %113, %75, %106 : vector<2x32xi1>, vector<2x32xf32>
    %115 = vector.shape_cast %111 : vector<2x1xi1> to vector<2x1xi1>
    %116 = vector.broadcast %115 : vector<2x1xi1> to vector<2x32xi1>
    %117 = arith.select %116, %78, %104 : vector<2x32xi1>, vector<2x32xf32>
    %118 = arith.index_cast %c2_i32 : i32 to index
    %c0_36 = arith.constant 0 : index
    %c0_37 = arith.constant 0 : index
    %119 = vector.load %arg7[%118, %c0_36, %c0_37] : memref<8x2x32xf32, #tpu.memory_space<vmem>>, vector<1x2x32xf32>
    %120 = vector.shape_cast %119 : vector<1x2x32xf32> to vector<2x32xf32>
    %121 = vector.shape_cast %114 : vector<2x32xf32> to vector<1x2x32xf32>
    tpu.vector_store %arg7[%118, %c0_36, %c0_37], %121 {strides = array<i32>} : memref<8x2x32xf32, #tpu.memory_space<vmem>>, vector<1x2x32xf32>,
    %c3_i32 = arith.constant 3 : i32
    %122 = arith.index_cast %c3_i32 : i32 to index
    %c0_38 = arith.constant 0 : index
    %c0_39 = arith.constant 0 : index
    %123 = vector.load %arg0[%122, %c0_38, %c0_39] : memref<8x2x32xf32, #tpu.memory_space<vmem>>, vector<1x2x32xf32>
    %124 = vector.shape_cast %123 : vector<1x2x32xf32> to vector<2x32xf32>
    %cst_40 = arith.constant dense<0.000000e+00> : vector<2x128xf32>
    %125 = tpu.matmul %124, %0, %cst_40 {dimension_numbers = #tpu.dot_dimension_numbers<[1], [0], [0], [1], [0, 0, 1, 1], [], []>} : vector<2x32xf32>, vector<32x128xf32>, vector<2x128xf32> -> vector<2x128xf32>
    %cst_41 = arith.constant dense<0.000000e+00> : vector<2x128xf32>
    %126 = tpu.matmul %114, %1, %cst_41 {dimension_numbers = #tpu.dot_dimension_numbers<[1], [0], [0], [1], [0, 0, 1, 1], [], []>} : vector<2x32xf32>, vector<32x128xf32>, vector<2x128xf32> -> vector<2x128xf32>
    %127 = arith.addf %125, %126 : vector<2x128xf32>
    %128 = vector.broadcast %2 : vector<1x128xf32> to vector<2x128xf32>
    %129 = arith.addf %127, %128 : vector<2x128xf32>
    %130 = vector.extract_strided_slice %129 {offsets = [0, 0], sizes = [2, 96], strides = [1, 1]} : vector<2x128xf32> to vector<2x96xf32>
    %131 = arith.negf %130 : vector<2x96xf32>
    %132 = math.exp %131 : vector<2x96xf32>
    %cst_42 = arith.constant 1.000000e+00 : f32
    %133 = vector.broadcast %cst_42 : f32 to vector<2x96xf32>
    %134 = arith.addf %133, %132 : vector<2x96xf32>
    %135 = arith.divf %133, %134 : vector<2x96xf32>
    %136 = vector.extract_strided_slice %135 {offsets = [0, 0], sizes = [2, 32], strides = [1, 1]} : vector<2x96xf32> to vector<2x32xf32>
    %137 = vector.extract_strided_slice %135 {offsets = [0, 32], sizes = [2, 32], strides = [1, 1]} : vector<2x96xf32> to vector<2x32xf32>
    %138 = vector.extract_strided_slice %135 {offsets = [0, 64], sizes = [2, 32], strides = [1, 1]} : vector<2x96xf32> to vector<2x32xf32>
    %139 = vector.extract_strided_slice %129 {offsets = [0, 96], sizes = [2, 32], strides = [1, 1]} : vector<2x128xf32> to vector<2x32xf32>
    %140 = math.tanh %139 : vector<2x32xf32>
    %141 = arith.mulf %137, %117 : vector<2x32xf32>
    %142 = arith.mulf %136, %140 : vector<2x32xf32>
    %143 = arith.addf %141, %142 : vector<2x32xf32>
    %144 = math.tanh %143 : vector<2x32xf32>
    %145 = arith.mulf %138, %144 : vector<2x32xf32>
    %146 = arith.index_cast %c3_i32 : i32 to index
    %c0_43 = arith.constant 0 : index
    %c0_44 = arith.constant 0 : index
    %147 = vector.load %arg1[%146, %c0_43, %c0_44] : memref<8x2x1xf32, #tpu.memory_space<vmem>>, vector<1x2x1xf32>
    %148 = vector.shape_cast %147 : vector<1x2x1xf32> to vector<2x1xf32>
    %cst_45 = arith.constant 0.000000e+00 : f32
    %149 = vector.broadcast %cst_45 : f32 to vector<2x1xf32>
    %150 = arith.cmpf one, %148, %149 : vector<2x1xf32>
    %151 = vector.shape_cast %150 : vector<2x1xi1> to vector<2x1xi1>
    %152 = vector.broadcast %151 : vector<2x1xi1> to vector<2x32xi1>
    %153 = arith.select %152, %114, %145 : vector<2x32xi1>, vector<2x32xf32>
    %154 = vector.shape_cast %150 : vector<2x1xi1> to vector<2x1xi1>
    %155 = vector.broadcast %154 : vector<2x1xi1> to vector<2x32xi1>
    %156 = arith.select %155, %117, %143 : vector<2x32xi1>, vector<2x32xf32>
    %157 = arith.index_cast %c3_i32 : i32 to index
    %c0_46 = arith.constant 0 : index
    %c0_47 = arith.constant 0 : index
    %158 = vector.load %arg7[%157, %c0_46, %c0_47] : memref<8x2x32xf32, #tpu.memory_space<vmem>>, vector<1x2x32xf32>
    %159 = vector.shape_cast %158 : vector<1x2x32xf32> to vector<2x32xf32>
    %160 = vector.shape_cast %153 : vector<2x32xf32> to vector<1x2x32xf32>
    tpu.vector_store %arg7[%157, %c0_46, %c0_47], %160 {strides = array<i32>} : memref<8x2x32xf32, #tpu.memory_space<vmem>>, vector<1x2x32xf32>,
    %c4_i32 = arith.constant 4 : i32
    %161 = arith.index_cast %c4_i32 : i32 to index
    %c0_48 = arith.constant 0 : index
    %c0_49 = arith.constant 0 : index
    %162 = vector.load %arg0[%161, %c0_48, %c0_49] : memref<8x2x32xf32, #tpu.memory_space<vmem>>, vector<1x2x32xf32>
    %163 = vector.shape_cast %162 : vector<1x2x32xf32> to vector<2x32xf32>
    %cst_50 = arith.constant dense<0.000000e+00> : vector<2x128xf32>
    %164 = tpu.matmul %163, %0, %cst_50 {dimension_numbers = #tpu.dot_dimension_numbers<[1], [0], [0], [1], [0, 0, 1, 1], [], []>} : vector<2x32xf32>, vector<32x128xf32>, vector<2x128xf32> -> vector<2x128xf32>
    %cst_51 = arith.constant dense<0.000000e+00> : vector<2x128xf32>
    %165 = tpu.matmul %153, %1, %cst_51 {dimension_numbers = #tpu.dot_dimension_numbers<[1], [0], [0], [1], [0, 0, 1, 1], [], []>} : vector<2x32xf32>, vector<32x128xf32>, vector<2x128xf32> -> vector<2x128xf32>
    %166 = arith.addf %164, %165 : vector<2x128xf32>
    %167 = vector.broadcast %2 : vector<1x128xf32> to vector<2x128xf32>
    %168 = arith.addf %166, %167 : vector<2x128xf32>
    %169 = vector.extract_strided_slice %168 {offsets = [0, 0], sizes = [2, 96], strides = [1, 1]} : vector<2x128xf32> to vector<2x96xf32>
    %170 = arith.negf %169 : vector<2x96xf32>
    %171 = math.exp %170 : vector<2x96xf32>
    %cst_52 = arith.constant 1.000000e+00 : f32
    %172 = vector.broadcast %cst_52 : f32 to vector<2x96xf32>
    %173 = arith.addf %172, %171 : vector<2x96xf32>
    %174 = arith.divf %172, %173 : vector<2x96xf32>
    %175 = vector.extract_strided_slice %174 {offsets = [0, 0], sizes = [2, 32], strides = [1, 1]} : vector<2x96xf32> to vector<2x32xf32>
    %176 = vector.extract_strided_slice %174 {offsets = [0, 32], sizes = [2, 32], strides = [1, 1]} : vector<2x96xf32> to vector<2x32xf32>
    %177 = vector.extract_strided_slice %174 {offsets = [0, 64], sizes = [2, 32], strides = [1, 1]} : vector<2x96xf32> to vector<2x32xf32>
    %178 = vector.extract_strided_slice %168 {offsets = [0, 96], sizes = [2, 32], strides = [1, 1]} : vector<2x128xf32> to vector<2x32xf32>
    %179 = math.tanh %178 : vector<2x32xf32>
    %180 = arith.mulf %176, %156 : vector<2x32xf32>
    %181 = arith.mulf %175, %179 : vector<2x32xf32>
    %182 = arith.addf %180, %181 : vector<2x32xf32>
    %183 = math.tanh %182 : vector<2x32xf32>
    %184 = arith.mulf %177, %183 : vector<2x32xf32>
    %185 = arith.index_cast %c4_i32 : i32 to index
    %c0_53 = arith.constant 0 : index
    %c0_54 = arith.constant 0 : index
    %186 = vector.load %arg1[%185, %c0_53, %c0_54] : memref<8x2x1xf32, #tpu.memory_space<vmem>>, vector<1x2x1xf32>
    %187 = vector.shape_cast %186 : vector<1x2x1xf32> to vector<2x1xf32>
    %cst_55 = arith.constant 0.000000e+00 : f32
    %188 = vector.broadcast %cst_55 : f32 to vector<2x1xf32>
    %189 = arith.cmpf one, %187, %188 : vector<2x1xf32>
    %190 = vector.shape_cast %189 : vector<2x1xi1> to vector<2x1xi1>
    %191 = vector.broadcast %190 : vector<2x1xi1> to vector<2x32xi1>
    %192 = arith.select %191, %153, %184 : vector<2x32xi1>, vector<2x32xf32>
    %193 = vector.shape_cast %189 : vector<2x1xi1> to vector<2x1xi1>
    %194 = vector.broadcast %193 : vector<2x1xi1> to vector<2x32xi1>
    %195 = arith.select %194, %156, %182 : vector<2x32xi1>, vector<2x32xf32>
    %196 = arith.index_cast %c4_i32 : i32 to index
    %c0_56 = arith.constant 0 : index
    %c0_57 = arith.constant 0 : index
    %197 = vector.load %arg7[%196, %c0_56, %c0_57] : memref<8x2x32xf32, #tpu.memory_space<vmem>>, vector<1x2x32xf32>
    %198 = vector.shape_cast %197 : vector<1x2x32xf32> to vector<2x32xf32>
    %199 = vector.shape_cast %192 : vector<2x32xf32> to vector<1x2x32xf32>
    tpu.vector_store %arg7[%196, %c0_56, %c0_57], %199 {strides = array<i32>} : memref<8x2x32xf32, #tpu.memory_space<vmem>>, vector<1x2x32xf32>,
    %c5_i32 = arith.constant 5 : i32
    %200 = arith.index_cast %c5_i32 : i32 to index
    %c0_58 = arith.constant 0 : index
    %c0_59 = arith.constant 0 : index
    %201 = vector.load %arg0[%200, %c0_58, %c0_59] : memref<8x2x32xf32, #tpu.memory_space<vmem>>, vector<1x2x32xf32>
    %202 = vector.shape_cast %201 : vector<1x2x32xf32> to vector<2x32xf32>
    %cst_60 = arith.constant dense<0.000000e+00> : vector<2x128xf32>
    %203 = tpu.matmul %202, %0, %cst_60 {dimension_numbers = #tpu.dot_dimension_numbers<[1], [0], [0], [1], [0, 0, 1, 1], [], []>} : vector<2x32xf32>, vector<32x128xf32>, vector<2x128xf32> -> vector<2x128xf32>
    %cst_61 = arith.constant dense<0.000000e+00> : vector<2x128xf32>
    %204 = tpu.matmul %192, %1, %cst_61 {dimension_numbers = #tpu.dot_dimension_numbers<[1], [0], [0], [1], [0, 0, 1, 1], [], []>} : vector<2x32xf32>, vector<32x128xf32>, vector<2x128xf32> -> vector<2x128xf32>
    %205 = arith.addf %203, %204 : vector<2x128xf32>
    %206 = vector.broadcast %2 : vector<1x128xf32> to vector<2x128xf32>
    %207 = arith.addf %205, %206 : vector<2x128xf32>
    %208 = vector.extract_strided_slice %207 {offsets = [0, 0], sizes = [2, 96], strides = [1, 1]} : vector<2x128xf32> to vector<2x96xf32>
    %209 = arith.negf %208 : vector<2x96xf32>
    %210 = math.exp %209 : vector<2x96xf32>
    %cst_62 = arith.constant 1.000000e+00 : f32
    %211 = vector.broadcast %cst_62 : f32 to vector<2x96xf32>
    %212 = arith.addf %211, %210 : vector<2x96xf32>
    %213 = arith.divf %211, %212 : vector<2x96xf32>
    %214 = vector.extract_strided_slice %213 {offsets = [0, 0], sizes = [2, 32], strides = [1, 1]} : vector<2x96xf32> to vector<2x32xf32>
    %215 = vector.extract_strided_slice %213 {offsets = [0, 32], sizes = [2, 32], strides = [1, 1]} : vector<2x96xf32> to vector<2x32xf32>
    %216 = vector.extract_strided_slice %213 {offsets = [0, 64], sizes = [2, 32], strides = [1, 1]} : vector<2x96xf32> to vector<2x32xf32>
    %217 = vector.extract_strided_slice %207 {offsets = [0, 96], sizes = [2, 32], strides = [1, 1]} : vector<2x128xf32> to vector<2x32xf32>
    %218 = math.tanh %217 : vector<2x32xf32>
    %219 = arith.mulf %215, %195 : vector<2x32xf32>
    %220 = arith.mulf %214, %218 : vector<2x32xf32>
    %221 = arith.addf %219, %220 : vector<2x32xf32>
    %222 = math.tanh %221 : vector<2x32xf32>
    %223 = arith.mulf %216, %222 : vector<2x32xf32>
    %224 = arith.index_cast %c5_i32 : i32 to index
    %c0_63 = arith.constant 0 : index
    %c0_64 = arith.constant 0 : index
    %225 = vector.load %arg1[%224, %c0_63, %c0_64] : memref<8x2x1xf32, #tpu.memory_space<vmem>>, vector<1x2x1xf32>
    %226 = vector.shape_cast %225 : vector<1x2x1xf32> to vector<2x1xf32>
    %cst_65 = arith.constant 0.000000e+00 : f32
    %227 = vector.broadcast %cst_65 : f32 to vector<2x1xf32>
    %228 = arith.cmpf one, %226, %227 : vector<2x1xf32>
    %229 = vector.shape_cast %228 : vector<2x1xi1> to vector<2x1xi1>
    %230 = vector.broadcast %229 : vector<2x1xi1> to vector<2x32xi1>
    %231 = arith.select %230, %192, %223 : vector<2x32xi1>, vector<2x32xf32>
    %232 = vector.shape_cast %228 : vector<2x1xi1> to vector<2x1xi1>
    %233 = vector.broadcast %232 : vector<2x1xi1> to vector<2x32xi1>
    %234 = arith.select %233, %195, %221 : vector<2x32xi1>, vector<2x32xf32>
    %235 = arith.index_cast %c5_i32 : i32 to index
    %c0_66 = arith.constant 0 : index
    %c0_67 = arith.constant 0 : index
    %236 = vector.load %arg7[%235, %c0_66, %c0_67] : memref<8x2x32xf32, #tpu.memory_space<vmem>>, vector<1x2x32xf32>
    %237 = vector.shape_cast %236 : vector<1x2x32xf32> to vector<2x32xf32>
    %238 = vector.shape_cast %231 : vector<2x32xf32> to vector<1x2x32xf32>
    tpu.vector_store %arg7[%235, %c0_66, %c0_67], %238 {strides = array<i32>} : memref<8x2x32xf32, #tpu.memory_space<vmem>>, vector<1x2x32xf32>,
    %c6_i32 = arith.constant 6 : i32
    %239 = arith.index_cast %c6_i32 : i32 to index
    %c0_68 = arith.constant 0 : index
    %c0_69 = arith.constant 0 : index
    %240 = vector.load %arg0[%239, %c0_68, %c0_69] : memref<8x2x32xf32, #tpu.memory_space<vmem>>, vector<1x2x32xf32>
    %241 = vector.shape_cast %240 : vector<1x2x32xf32> to vector<2x32xf32>
    %cst_70 = arith.constant dense<0.000000e+00> : vector<2x128xf32>
    %242 = tpu.matmul %241, %0, %cst_70 {dimension_numbers = #tpu.dot_dimension_numbers<[1], [0], [0], [1], [0, 0, 1, 1], [], []>} : vector<2x32xf32>, vector<32x128xf32>, vector<2x128xf32> -> vector<2x128xf32>
    %cst_71 = arith.constant dense<0.000000e+00> : vector<2x128xf32>
    %243 = tpu.matmul %231, %1, %cst_71 {dimension_numbers = #tpu.dot_dimension_numbers<[1], [0], [0], [1], [0, 0, 1, 1], [], []>} : vector<2x32xf32>, vector<32x128xf32>, vector<2x128xf32> -> vector<2x128xf32>
    %244 = arith.addf %242, %243 : vector<2x128xf32>
    %245 = vector.broadcast %2 : vector<1x128xf32> to vector<2x128xf32>
    %246 = arith.addf %244, %245 : vector<2x128xf32>
    %247 = vector.extract_strided_slice %246 {offsets = [0, 0], sizes = [2, 96], strides = [1, 1]} : vector<2x128xf32> to vector<2x96xf32>
    %248 = arith.negf %247 : vector<2x96xf32>
    %249 = math.exp %248 : vector<2x96xf32>
    %cst_72 = arith.constant 1.000000e+00 : f32
    %250 = vector.broadcast %cst_72 : f32 to vector<2x96xf32>
    %251 = arith.addf %250, %249 : vector<2x96xf32>
    %252 = arith.divf %250, %251 : vector<2x96xf32>
    %253 = vector.extract_strided_slice %252 {offsets = [0, 0], sizes = [2, 32], strides = [1, 1]} : vector<2x96xf32> to vector<2x32xf32>
    %254 = vector.extract_strided_slice %252 {offsets = [0, 32], sizes = [2, 32], strides = [1, 1]} : vector<2x96xf32> to vector<2x32xf32>
    %255 = vector.extract_strided_slice %252 {offsets = [0, 64], sizes = [2, 32], strides = [1, 1]} : vector<2x96xf32> to vector<2x32xf32>
    %256 = vector.extract_strided_slice %246 {offsets = [0, 96], sizes = [2, 32], strides = [1, 1]} : vector<2x128xf32> to vector<2x32xf32>
    %257 = math.tanh %256 : vector<2x32xf32>
    %258 = arith.mulf %254, %234 : vector<2x32xf32>
    %259 = arith.mulf %253, %257 : vector<2x32xf32>
    %260 = arith.addf %258, %259 : vector<2x32xf32>
    %261 = math.tanh %260 : vector<2x32xf32>
    %262 = arith.mulf %255, %261 : vector<2x32xf32>
    %263 = arith.index_cast %c6_i32 : i32 to index
    %c0_73 = arith.constant 0 : index
    %c0_74 = arith.constant 0 : index
    %264 = vector.load %arg1[%263, %c0_73, %c0_74] : memref<8x2x1xf32, #tpu.memory_space<vmem>>, vector<1x2x1xf32>
    %265 = vector.shape_cast %264 : vector<1x2x1xf32> to vector<2x1xf32>
    %cst_75 = arith.constant 0.000000e+00 : f32
    %266 = vector.broadcast %cst_75 : f32 to vector<2x1xf32>
    %267 = arith.cmpf one, %265, %266 : vector<2x1xf32>
    %268 = vector.shape_cast %267 : vector<2x1xi1> to vector<2x1xi1>
    %269 = vector.broadcast %268 : vector<2x1xi1> to vector<2x32xi1>
    %270 = arith.select %269, %231, %262 : vector<2x32xi1>, vector<2x32xf32>
    %271 = vector.shape_cast %267 : vector<2x1xi1> to vector<2x1xi1>
    %272 = vector.broadcast %271 : vector<2x1xi1> to vector<2x32xi1>
    %273 = arith.select %272, %234, %260 : vector<2x32xi1>, vector<2x32xf32>
    %274 = arith.index_cast %c6_i32 : i32 to index
    %c0_76 = arith.constant 0 : index
    %c0_77 = arith.constant 0 : index
    %275 = vector.load %arg7[%274, %c0_76, %c0_77] : memref<8x2x32xf32, #tpu.memory_space<vmem>>, vector<1x2x32xf32>
    %276 = vector.shape_cast %275 : vector<1x2x32xf32> to vector<2x32xf32>
    %277 = vector.shape_cast %270 : vector<2x32xf32> to vector<1x2x32xf32>
    tpu.vector_store %arg7[%274, %c0_76, %c0_77], %277 {strides = array<i32>} : memref<8x2x32xf32, #tpu.memory_space<vmem>>, vector<1x2x32xf32>,
    %c7_i32 = arith.constant 7 : i32
    %278 = arith.index_cast %c7_i32 : i32 to index
    %c0_78 = arith.constant 0 : index
    %c0_79 = arith.constant 0 : index
    %279 = vector.load %arg0[%278, %c0_78, %c0_79] : memref<8x2x32xf32, #tpu.memory_space<vmem>>, vector<1x2x32xf32>
    %280 = vector.shape_cast %279 : vector<1x2x32xf32> to vector<2x32xf32>
    %cst_80 = arith.constant dense<0.000000e+00> : vector<2x128xf32>
    %281 = tpu.matmul %280, %0, %cst_80 {dimension_numbers = #tpu.dot_dimension_numbers<[1], [0], [0], [1], [0, 0, 1, 1], [], []>} : vector<2x32xf32>, vector<32x128xf32>, vector<2x128xf32> -> vector<2x128xf32>
    %cst_81 = arith.constant dense<0.000000e+00> : vector<2x128xf32>
    %282 = tpu.matmul %270, %1, %cst_81 {dimension_numbers = #tpu.dot_dimension_numbers<[1], [0], [0], [1], [0, 0, 1, 1], [], []>} : vector<2x32xf32>, vector<32x128xf32>, vector<2x128xf32> -> vector<2x128xf32>
    %283 = arith.addf %281, %282 : vector<2x128xf32>
    %284 = vector.broadcast %2 : vector<1x128xf32> to vector<2x128xf32>
    %285 = arith.addf %283, %284 : vector<2x128xf32>
    %286 = vector.extract_strided_slice %285 {offsets = [0, 0], sizes = [2, 96], strides = [1, 1]} : vector<2x128xf32> to vector<2x96xf32>
    %287 = arith.negf %286 : vector<2x96xf32>
    %288 = math.exp %287 : vector<2x96xf32>
    %cst_82 = arith.constant 1.000000e+00 : f32
    %289 = vector.broadcast %cst_82 : f32 to vector<2x96xf32>
    %290 = arith.addf %289, %288 : vector<2x96xf32>
    %291 = arith.divf %289, %290 : vector<2x96xf32>
    %292 = vector.extract_strided_slice %291 {offsets = [0, 0], sizes = [2, 32], strides = [1, 1]} : vector<2x96xf32> to vector<2x32xf32>
    %293 = vector.extract_strided_slice %291 {offsets = [0, 32], sizes = [2, 32], strides = [1, 1]} : vector<2x96xf32> to vector<2x32xf32>
    %294 = vector.extract_strided_slice %291 {offsets = [0, 64], sizes = [2, 32], strides = [1, 1]} : vector<2x96xf32> to vector<2x32xf32>
    %295 = vector.extract_strided_slice %285 {offsets = [0, 96], sizes = [2, 32], strides = [1, 1]} : vector<2x128xf32> to vector<2x32xf32>
    %296 = math.tanh %295 : vector<2x32xf32>
    %297 = arith.mulf %293, %273 : vector<2x32xf32>
    %298 = arith.mulf %292, %296 : vector<2x32xf32>
    %299 = arith.addf %297, %298 : vector<2x32xf32>
    %300 = math.tanh %299 : vector<2x32xf32>
    %301 = arith.mulf %294, %300 : vector<2x32xf32>
    %302 = arith.index_cast %c7_i32 : i32 to index
    %c0_83 = arith.constant 0 : index
    %c0_84 = arith.constant 0 : index
    %303 = vector.load %arg1[%302, %c0_83, %c0_84] : memref<8x2x1xf32, #tpu.memory_space<vmem>>, vector<1x2x1xf32>
    %304 = vector.shape_cast %303 : vector<1x2x1xf32> to vector<2x1xf32>
    %cst_85 = arith.constant 0.000000e+00 : f32
    %305 = vector.broadcast %cst_85 : f32 to vector<2x1xf32>
    %306 = arith.cmpf one, %304, %305 : vector<2x1xf32>
    %307 = vector.shape_cast %306 : vector<2x1xi1> to vector<2x1xi1>
    %308 = vector.broadcast %307 : vector<2x1xi1> to vector<2x32xi1>
    %309 = arith.select %308, %270, %301 : vector<2x32xi1>, vector<2x32xf32>
    %310 = vector.shape_cast %306 : vector<2x1xi1> to vector<2x1xi1>
    %311 = vector.broadcast %310 : vector<2x1xi1> to vector<2x32xi1>
    %312 = arith.select %311, %273, %299 : vector<2x32xi1>, vector<2x32xf32>
    %313 = arith.index_cast %c7_i32 : i32 to index
    %c0_86 = arith.constant 0 : index
    %c0_87 = arith.constant 0 : index
    %314 = vector.load %arg7[%313, %c0_86, %c0_87] : memref<8x2x32xf32, #tpu.memory_space<vmem>>, vector<1x2x32xf32>
    %315 = vector.shape_cast %314 : vector<1x2x32xf32> to vector<2x32xf32>
    %316 = vector.shape_cast %309 : vector<2x32xf32> to vector<1x2x32xf32>
    tpu.vector_store %arg7[%313, %c0_86, %c0_87], %316 {strides = array<i32>} : memref<8x2x32xf32, #tpu.memory_space<vmem>>, vector<1x2x32xf32>,
    %c8_i32 = arith.constant 8 : i32
    %c0_88 = arith.constant 0 : index
    %c0_89 = arith.constant 0 : index
    %317 = vector.load %arg8[%c0_88, %c0_89] : memref<2x32xf32, #tpu.memory_space<vmem>>, vector<2x32xf32>
    tpu.vector_store %arg8[%c0_88, %c0_89], %309 {strides = array<i32>} : memref<2x32xf32, #tpu.memory_space<vmem>>, vector<2x32xf32>,
    %c0_90 = arith.constant 0 : index
    %c0_91 = arith.constant 0 : index
    %318 = vector.load %arg9[%c0_90, %c0_91] : memref<2x32xf32, #tpu.memory_space<vmem>>, vector<2x32xf32>
    tpu.vector_store %arg9[%c0_90, %c0_91], %312 {strides = array<i32>} : memref<2x32xf32, #tpu.memory_space<vmem>>, vector<2x32xf32>,
    return
  }
}

</mosaic_0001>

<llo_original>
// kernel: tpu_custom_call.1
$region0: #{tpu_custom_call.1}
  #allocation0 [shape = 'u32[]', space=smem, size = 0x4, offset = 0x4, fixed_abs, tag = 'smem constant byte address 0x4 - core index']
  #allocation1 [shape = 'u32[144,128]{1,0:T(1,128)}', space=vmem, size = 0x12000, scoped, tag = 'internal scratch']
  %s0 = inlined_call_operand.vmem [shape: f32[8,2,32], index: 0, kind: input, shape index: {}]
  %s1 = inlined_call_operand.vmem [shape: f32[8,2,1], index: 1, kind: input, shape index: {}]
  %s2 = inlined_call_operand.hbm [shape: f32[32,128], index: 2, kind: input, shape index: {}]
  %s3 = inlined_call_operand.hbm [shape: f32[32,128], index: 3, kind: input, shape index: {}]
  %s4 = inlined_call_operand.vmem [shape: f32[1,128], index: 4, kind: input, shape index: {}]
  %s5 = inlined_call_operand.vmem [shape: f32[2,32], index: 5, kind: input, shape index: {}]
  %s6 = inlined_call_operand.vmem [shape: f32[2,32], index: 6, kind: input, shape index: {}]
  %s7 = inlined_call_operand.hbm [shape: f32[8,2,32], index: 7, kind: output, shape index: {0}]
  %s8 = inlined_call_operand.hbm [shape: f32[2,32], index: 8, kind: output, shape index: {1}]
  %s9 = inlined_call_operand.hbm [shape: f32[2,32], index: 9, kind: output, shape index: {2}]
  %10 = xla_tuple %s7, %s8, %s9
  %s11 = sld [smem:[#allocation0]]
  $region62: #{tpu_custom_call.1} parent=0
    _
  %s13 = ssub.s32 1, %s11
  %s14 = scalar_select 0, %s13, %s11
  $region1: #{tpu_custom_call.1} parent=0
    #allocation2 [shape = 'u8[16384]{0}', space=vmem, size = 0x4000, scoped, tag = 'input window, operand 2, single buffered']
    #allocation3 [shape = 's32[1]{0}', space=sflag, size = 0x4, scoped, tag = 'scoped memory for tpu_custom_call.1']
    #allocation4 [shape = 's32[1]{0}', space=sflag, size = 0x4, scoped, tag = 'scoped memory for tpu_custom_call.1']
    #allocation5 [shape = 'u8[16384]{0}', space=vmem, size = 0x4000, scoped, tag = 'input window, operand 3, single buffered']
    #allocation6 [shape = 's32[1]{0}', space=sflag, size = 0x4, scoped, tag = 'scoped memory for tpu_custom_call.1']
    #allocation7 [shape = 'u8[8192]{0}', space=vmem, size = 0x2000, scoped, tag = 'output window, operand 0, single buffered']
    #allocation8 [shape = 'u8[1024]{0}', space=vmem, size = 0x400, scoped, tag = 'output window, operand 1, single buffered']
    #allocation9 [shape = 's32[1]{0}', space=sflag, size = 0x4, scoped, tag = 'scoped memory for tpu_custom_call.1']
    #allocation10 [shape = 'u8[1024]{0}', space=vmem, size = 0x400, scoped, tag = 'output window, operand 2, single buffered']
    %15 = vsyncpa [#allocation3], 0
    %16 = vsyncpa [#allocation6], 0
    %17 = vsyncpa [#allocation4], 0
    %18 = vsyncpa [#allocation9], 0
    // Predicated region
    $region2: #{tpu_custom_call.1} parent=1 // pred_check
      _
    $region3: #{tpu_custom_call.1} parent=1 // pred_check_branch
      %20 = sbr.rel (0) target = $region5
    $region4: #{tpu_custom_call.1} parent=1 // pred_region
      _
    $region5: #{tpu_custom_call.1} parent=1 // pred_fallthru
      _
    // Predicated region
    $region6: #{tpu_custom_call.1} parent=1 // pred_check
      _
    $region7: #{tpu_custom_call.1} parent=1 // pred_check_branch
      %22 = sbr.rel (0) target = $region9
    $region8: #{tpu_custom_call.1} parent=1 // pred_region
      _
    $region9: #{tpu_custom_call.1} parent=1 // pred_fallthru
      _
    // Predicated region
    $region10: #{tpu_custom_call.1} parent=1 // pred_check
      _
    $region11: #{tpu_custom_call.1} parent=1 // pred_check_branch
      %24 = sbr.rel (0) target = $region13
    $region12: #{tpu_custom_call.1} parent=1 // pred_region
      %s26 = ssub.s32 512, 512
      %27 = vsyncadd [#allocation3], %s26
      %s28 = sshll.u32 [#allocation2], 4
      %s29 = int_to_ptr.vmem [resolvable:$true] %s28
      %34 = dma.hbm_to_vmem [thread:$0]  %s2, 512, %s29, [#allocation3], 128, 128, 8
    $region13: #{tpu_custom_call.1} parent=1 // pred_fallthru
      _
    // Predicated region
    $region14: #{tpu_custom_call.1} parent=1 // pred_check
      _
    $region15: #{tpu_custom_call.1} parent=1 // pred_check_branch
      %36 = sbr.rel (0) target = $region17
    $region16: #{tpu_custom_call.1} parent=1 // pred_region
      %s38 = ssub.s32 512, 512
      %39 = vsyncadd [#allocation6], %s38
      %s40 = sshll.u32 [#allocation5], 4
      %s41 = int_to_ptr.vmem [resolvable:$true] %s40
      %46 = dma.hbm_to_vmem [thread:$0]  %s3, 512, %s41, [#allocation6], 128, 128, 8
    $region17: #{tpu_custom_call.1} parent=1 // pred_fallthru
      _
    // Predicated region
    $region18: #{tpu_custom_call.1} parent=1 // pred_check
      _
    $region19: #{tpu_custom_call.1} parent=1 // pred_check_branch
      %48 = sbr.rel (0) target = $region21
    $region20: #{tpu_custom_call.1} parent=1 // pred_region
      _
    $region21: #{tpu_custom_call.1} parent=1 // pred_fallthru
      _
    // Predicated region
    $region22: #{tpu_custom_call.1} parent=1 // pred_check
      _
    $region23: #{tpu_custom_call.1} parent=1 // pred_check_branch
      %50 = sbr.rel (0) target = $region25
    $region24: #{tpu_custom_call.1} parent=1 // pred_region
      _
    $region25: #{tpu_custom_call.1} parent=1 // pred_fallthru
      _
    // Predicated region
    $region26: #{tpu_custom_call.1} parent=1 // pred_check
      _
    $region27: #{tpu_custom_call.1} parent=1 // pred_check_branch
      %52 = sbr.rel (0) target = $region29
    $region28: #{tpu_custom_call.1} parent=1 // pred_region
      _
    $region29: #{tpu_custom_call.1} parent=1 // pred_fallthru
      _
    // Predicated region
    $region30: #{tpu_custom_call.1} parent=1 // pred_check
      _
    $region31: #{tpu_custom_call.1} parent=1 // pred_check_branch
      %54 = sbr.rel (0) target = $region33
    $region32: #{tpu_custom_call.1} parent=1 // pred_region
      %55 = dma.done [#allocation3], 512
    $region33: #{tpu_custom_call.1} parent=1 // pred_fallthru
      _
    // Predicated region
    $region34: #{tpu_custom_call.1} parent=1 // pred_check
      _
    $region35: #{tpu_custom_call.1} parent=1 // pred_check_branch
      %57 = sbr.rel (0) target = $region37
    $region36: #{tpu_custom_call.1} parent=1 // pred_region
      %58 = dma.done [#allocation6], 512
    $region37: #{tpu_custom_call.1} parent=1 // pred_fallthru
      _
    %v59 = vld [vmem:[#allocation2] sm:$0xff]
    %v60 = vld [vmem:[#allocation2 + $0x8] sm:$0xff]
    %v61 = vld [vmem:[#allocation2 + $0x10] sm:$0xff]
    %v62 = vld [vmem:[#allocation2 + $0x18] sm:$0xff]
    %v63 = vld [vmem:[#allocation5] sm:$0xff]
    %v64 = vld [vmem:[#allocation5 + $0x8] sm:$0xff]
    %v65 = vld [vmem:[#allocation5 + $0x10] sm:$0xff]
    %v66 = vld [vmem:[#allocation5 + $0x18] sm:$0xff]
    %v67 = vld [vmem:[%s4] sm:$0x1]
    %v68 = vld [vmem:[%s5] sm:$0x3]
    %v69 = vld [vmem:[%s6] sm:$0x3]
    %v70 = vld [vmem:[%s0] sm:$0x3]
    %vm71 = vcmask 261120
    %v73 = vsel %vm71, %v68, 0
    %75 = vmatprep.subr.mxu0 0.0
    %76 = vmatpush1.msra.mxu0 %v63
    %77 = vmatprep.subr.mxu0 0.0
    %78 = vmatpush1.msra.mxu0 %v64
    %79 = vmatprep.subr.mxu0 0.0
    %80 = vmatpush1.msra.mxu0 %v65
    %81 = vmatprep.subr.mxu0 0.0
    %82 = vmatpush1.msra.mxu0 %v66
    %83 = vmatprep.subr.mxu0 0.0
    %84 = vmatpush1.msra.mxu0 0.0
    %85 = vmatprep.subr.mxu0 0.0
    %86 = vmatpush1.msra.mxu0 0.0
    %87 = vmatprep.subr.mxu0 0.0
    %88 = vmatpush1.msra.mxu0 0.0
    %89 = vmatprep.subr.mxu0 0.0
    %90 = vmatpush1.msra.mxu0 0.0
    %91 = vmatprep.subr.mxu0 0.0
    %92 = vmatpush1.msra.mxu0 0.0
    %93 = vmatprep.subr.mxu0 0.0
    %94 = vmatpush1.msra.mxu0 0.0
    %95 = vmatprep.subr.mxu0 0.0
    %96 = vmatpush1.msra.mxu0 0.0
    %97 = vmatprep.subr.mxu0 0.0
    %98 = vmatpush1.msra.mxu0 0.0
    %99 = vmatprep.subr.mxu0 0.0
    %100 = vmatpush1.msra.mxu0 0.0
    %101 = vmatprep.subr.mxu0 0.0
    %102 = vmatpush1.msra.mxu0 0.0
    %103 = vmatprep.subr.mxu0 0.0
    %104 = vmatpush1.msra.mxu0 0.0
    %105 = vmatprep.subr.mxu0 0.0
    %106 = vmatpush1.msra.mxu0 0.0
    %107 = vmatprep.subr.mxu0 0.0
    %108 = vmatpush1.msra.mxu0 0.0
    %109 = vmatprep.subr.mxu0 0.0
    %110 = vmatpush1.msra.mxu0 0.0
    %111 = vmatprep.subr.mxu0 0.0
    %112 = vmatpush1.msra.mxu0 0.0
    %113 = vmatprep.subr.mxu0 0.0
    %114 = vmatpush1.msra.mxu0 0.0
    %115 = vmatprep.subr.mxu0 0.0
    %116 = vmatpush1.msra.mxu0 0.0
    %117 = vmatprep.subr.mxu0 0.0
    %118 = vmatpush1.msra.mxu0 0.0
    %119 = vmatprep.subr.mxu0 0.0
    %120 = vmatpush1.msra.mxu0 0.0
    %121 = vmatprep.subr.mxu0 0.0
    %122 = vmatpush1.msra.mxu0 0.0
    %123 = vmatprep.subr.mxu0 0.0
    %124 = vmatpush1.msra.mxu0 0.0
    %125 = vmatprep.subr.mxu0 0.0
    %126 = vmatpush1.msra.mxu0 0.0
    %127 = vmatprep.subr.mxu0 0.0
    %128 = vmatpush1.msra.mxu0 0.0
    %129 = vmatprep.subr.mxu0 0.0
    %130 = vmatpush1.msra.mxu0 0.0
    %131 = vmatprep.subr.mxu0 0.0
    %132 = vmatpush1.msra.mxu0 0.0
    %133 = vmatprep.subr.mxu0 0.0
    %134 = vmatpush1.msra.mxu0 0.0
    %135 = vmatprep.subr.mxu0 0.0
    %136 = vmatpush1.msra.mxu0 0.0
    %137 = vmatprep.subr.mxu0 0.0
    %138 = vmatpush1.msra.mxu0 0.0
    %139 = vmatprep.mubr.f32.mxu0 0.0
    %140 = vmatmul.mubr.f32.gmra.mrb[0].mxu0 %v73
    %v141 = vpop.f32.mrb[0].mxu0
    %v142 = vadd.f32 0.0, %v141
    %v143 = vpop.f32.mrb[0].mxu0
    %144 = vdwg.mxu0
    %v146 = vsel %vm71, %v70, 0
    %148 = vmatprep.subr.mxu0 0.0
    %149 = vmatpush1.msra.mxu0 %v59
    %150 = vmatprep.subr.mxu0 0.0
    %151 = vmatpush1.msra.mxu0 %v60
    %152 = vmatprep.subr.mxu0 0.0
    %153 = vmatpush1.msra.mxu0 %v61
    %154 = vmatprep.subr.mxu0 0.0
    %155 = vmatpush1.msra.mxu0 %v62
    %156 = vmatprep.subr.mxu0 0.0
    %157 = vmatpush1.msra.mxu0 0.0
    %158 = vmatprep.subr.mxu0 0.0
    %159 = vmatpush1.msra.mxu0 0.0
    %160 = vmatprep.subr.mxu0 0.0
    %161 = vmatpush1.msra.mxu0 0.0
    %162 = vmatprep.subr.mxu0 0.0
    %163 = vmatpush1.msra.mxu0 0.0
    %164 = vmatprep.subr.mxu0 0.0
    %165 = vmatpush1.msra.mxu0 0.0
    %166 = vmatprep.subr.mxu0 0.0
    %167 = vmatpush1.msra.mxu0 0.0
    %168 = vmatprep.subr.mxu0 0.0
    %169 = vmatpush1.msra.mxu0 0.0
    %170 = vmatprep.subr.mxu0 0.0
    %171 = vmatpush1.msra.mxu0 0.0
    %172 = vmatprep.subr.mxu0 0.0
    %173 = vmatpush1.msra.mxu0 0.0
    %174 = vmatprep.subr.mxu0 0.0
    %175 = vmatpush1.msra.mxu0 0.0
    %176 = vmatprep.subr.mxu0 0.0
    %177 = vmatpush1.msra.mxu0 0.0
    %178 = vmatprep.subr.mxu0 0.0
    %179 = vmatpush1.msra.mxu0 0.0
    %180 = vmatprep.subr.mxu0 0.0
    %181 = vmatpush1.msra.mxu0 0.0
    %182 = vmatprep.subr.mxu0 0.0
    %183 = vmatpush1.msra.mxu0 0.0
    %184 = vmatprep.subr.mxu0 0.0
    %185 = vmatpush1.msra.mxu0 0.0
    %186 = vmatprep.subr.mxu0 0.0
    %187 = vmatpush1.msra.mxu0 0.0
    %188 = vmatprep.subr.mxu0 0.0
    %189 = vmatpush1.msra.mxu0 0.0
    %190 = vmatprep.subr.mxu0 0.0
    %191 = vmatpush1.msra.mxu0 0.0
    %192 = vmatprep.subr.mxu0 0.0
    %193 = vmatpush1.msra.mxu0 0.0
    %194 = vmatprep.subr.mxu0 0.0
    %195 = vmatpush1.msra.mxu0 0.0
    %196 = vmatprep.subr.mxu0 0.0
    %197 = vmatpush1.msra.mxu0 0.0
    %198 = vmatprep.subr.mxu0 0.0
    %199 = vmatpush1.msra.mxu0 0.0
    %200 = vmatprep.subr.mxu0 0.0
    %201 = vmatpush1.msra.mxu0 0.0
    %202 = vmatprep.subr.mxu0 0.0
    %203 = vmatpush1.msra.mxu0 0.0
    %204 = vmatprep.subr.mxu0 0.0
    %205 = vmatpush1.msra.mxu0 0.0
    %206 = vmatprep.subr.mxu0 0.0
    %207 = vmatpush1.msra.mxu0 0.0
    %208 = vmatprep.subr.mxu0 0.0
    %209 = vmatpush1.msra.mxu0 0.0
    %210 = vmatprep.subr.mxu0 0.0
    %211 = vmatpush1.msra.mxu0 0.0
    %212 = vmatprep.mubr.f32.mxu0 0.0
    %213 = vmatmul.mubr.f32.gmra.mrb[0].mxu0 %v146
    %v214 = vpop.f32.mrb[0].mxu0
    %v215 = vadd.f32 %v142, %v214
    %v216 = vpop.f32.mrb[0].mxu0
    %217 = vdwg.mxu0
    %v219 = vlaneseq
    %v220 = vshrl.u32 %v219, 7
    %v221 = vsub.s32 0, %v220
    %v222 = vrot.slane %v67, %v221
    %v224 = vadd.f32 %v215, %v222
    %v225 = vxor.u32 %v224, 2147483648
    %v226 = vmul.f32 %v225, 1.442695
    %v227 = vpow.pop %v226
    %v228 = vadd.f32 %v227, 1.0
    %v229 = vrcp.pop %v228
    %v230 = vmul.f32 1.0, %v229
    %v231 = vtanh.pop %v224
    %233 = vrot.lane.b32.xlu0 %v69, 32
    %v234 = vpop.permute.xlu0 %233
    %v236 = vmul.f32 %v230, %v234
    %238 = vrot.lane.b32.xlu0 %v231, 32
    %v239 = vpop.permute.xlu0 %238
    %v241 = vmul.f32 %v230, %v239
    %243 = vrot.lane.b32.xlu0 %v241, 32
    %v244 = vpop.permute.xlu0 %243
    %v246 = vadd.f32 %v236, %v244
    %v247 = vtanh.pop %v246
    %249 = vrot.lane.b32.xlu0 %v247, 32
    %v250 = vpop.permute.xlu0 %249
    %v252 = vmul.f32 %v230, %v250
    %v253 = vld [vmem:[%s1] sm:$0x3]
    %vm254 = vcmp.ne.f32.partialorder %v253, 0.0
    %v255 = vsel %vm254, 1, 0
    %256 = vset.pattern.permute.xlu0 0
    %257 = vperm.xlu0 %256, %v255
    %v258 = vpop.permute.xlu0 %257
    %vm259 = vcmp.eq.s32.totalorder %v258, 1
    %261 = vrot.lane.b32.xlu0 %v252, 64
    %v262 = vpop.permute.xlu0 %261
    %v264 = vsel %vm259, %v68, %v262
    %266 = vrot.lane.b32.xlu0 %v246, 96
    %v267 = vpop.permute.xlu0 %266
    %v269 = vsel %vm259, %v69, %v267
    %vm270 = vcmask 254976
    %271 = vst.msk [vmem:[#allocation7] sm:$0x3] %vm270, %v264
    %s272 = scalar_lea.vmem %s0, 2
    %v273 = vld [vmem:[%s272] sm:$0x3]
    %v275 = vsel %vm71, %v264, 0
    %277 = vmatprep.subr.mxu0 0.0
    %278 = vmatpush1.msra.mxu0 %v63
    %279 = vmatprep.subr.mxu0 0.0
    %280 = vmatpush1.msra.mxu0 %v64
    %281 = vmatprep.subr.mxu0 0.0
    %282 = vmatpush1.msra.mxu0 %v65
    %283 = vmatprep.subr.mxu0 0.0
    %284 = vmatpush1.msra.mxu0 %v66
    %285 = vmatprep.subr.mxu0 0.0
    %286 = vmatpush1.msra.mxu0 0.0
    %287 = vmatprep.subr.mxu0 0.0
    %288 = vmatpush1.msra.mxu0 0.0
    %289 = vmatprep.subr.mxu0 0.0
    %290 = vmatpush1.msra.mxu0 0.0
    %291 = vmatprep.subr.mxu0 0.0
    %292 = vmatpush1.msra.mxu0 0.0
    %293 = vmatprep.subr.mxu0 0.0
    %294 = vmatpush1.msra.mxu0 0.0
    %295 = vmatprep.subr.mxu0 0.0
    %296 = vmatpush1.msra.mxu0 0.0
    %297 = vmatprep.subr.mxu0 0.0
    %298 = vmatpush1.msra.mxu0 0.0
    %299 = vmatprep.subr.mxu0 0.0
    %300 = vmatpush1.msra.mxu0 0.0
    %301 = vmatprep.subr.mxu0 0.0
    %302 = vmatpush1.msra.mxu0 0.0
    %303 = vmatprep.subr.mxu0 0.0
    %304 = vmatpush1.msra.mxu0 0.0
    %305 = vmatprep.subr.mxu0 0.0
    %306 = vmatpush1.msra.mxu0 0.0
    %307 = vmatprep.subr.mxu0 0.0
    %308 = vmatpush1.msra.mxu0 0.0
    %309 = vmatprep.subr.mxu0 0.0
    %310 = vmatpush1.msra.mxu0 0.0
    %311 = vmatprep.subr.mxu0 0.0
    %312 = vmatpush1.msra.mxu0 0.0
    %313 = vmatprep.subr.mxu0 0.0
    %314 = vmatpush1.msra.mxu0 0.0
    %315 = vmatprep.subr.mxu0 0.0
    %316 = vmatpush1.msra.mxu0 0.0
    %317 = vmatprep.subr.mxu0 0.0
    %318 = vmatpush1.msra.mxu0 0.0
    %319 = vmatprep.subr.mxu0 0.0
    %320 = vmatpush1.msra.mxu0 0.0
    %321 = vmatprep.subr.mxu0 0.0
    %322 = vmatpush1.msra.mxu0 0.0
    %323 = vmatprep.subr.mxu0 0.0
    %324 = vmatpush1.msra.mxu0 0.0
    %325 = vmatprep.subr.mxu0 0.0
    %326 = vmatpush1.msra.mxu0 0.0
    %327 = vmatprep.subr.mxu0 0.0
    %328 = vmatpush1.msra.mxu0 0.0
    %329 = vmatprep.subr.mxu0 0.0
    %330 = vmatpush1.msra.mxu0 0.0
    %331 = vmatprep.subr.mxu0 0.0
    %332 = vmatpush1.msra.mxu0 0.0
    %333 = vmatprep.subr.mxu0 0.0
    %334 = vmatpush1.msra.mxu0 0.0
    %335 = vmatprep.subr.mxu0 0.0
    %336 = vmatpush1.msra.mxu0 0.0
    %337 = vmatprep.subr.mxu0 0.0
    %338 = vmatpush1.msra.mxu0 0.0
    %339 = vmatprep.subr.mxu0 0.0
    %340 = vmatpush1.msra.mxu0 0.0
    %341 = vmatprep.mubr.f32.mxu0 0.0
    %342 = vmatmul.mubr.f32.gmra.mrb[0].mxu0 %v275
    %v343 = vpop.f32.mrb[0].mxu0
    %v344 = vadd.f32 0.0, %v343
    %v345 = vpop.f32.mrb[0].mxu0
    %346 = vdwg.mxu0
    %v348 = vsel %vm71, %v273, 0
    %350 = vmatprep.subr.mxu0 0.0
    %351 = vmatpush1.msra.mxu0 %v59
    %352 = vmatprep.subr.mxu0 0.0
    %353 = vmatpush1.msra.mxu0 %v60
    %354 = vmatprep.subr.mxu0 0.0
    %355 = vmatpush1.msra.mxu0 %v61
    %356 = vmatprep.subr.mxu0 0.0
    %357 = vmatpush1.msra.mxu0 %v62
    %358 = vmatprep.subr.mxu0 0.0
    %359 = vmatpush1.msra.mxu0 0.0
    %360 = vmatprep.subr.mxu0 0.0
    %361 = vmatpush1.msra.mxu0 0.0
    %362 = vmatprep.subr.mxu0 0.0
    %363 = vmatpush1.msra.mxu0 0.0
    %364 = vmatprep.subr.mxu0 0.0
    %365 = vmatpush1.msra.mxu0 0.0
    %366 = vmatprep.subr.mxu0 0.0
    %367 = vmatpush1.msra.mxu0 0.0
    %368 = vmatprep.subr.mxu0 0.0
    %369 = vmatpush1.msra.mxu0 0.0
    %370 = vmatprep.subr.mxu0 0.0
    %371 = vmatpush1.msra.mxu0 0.0
    %372 = vmatprep.subr.mxu0 0.0
    %373 = vmatpush1.msra.mxu0 0.0
    %374 = vmatprep.subr.mxu0 0.0
    %375 = vmatpush1.msra.mxu0 0.0
    %376 = vmatprep.subr.mxu0 0.0
    %377 = vmatpush1.msra.mxu0 0.0
    %378 = vmatprep.subr.mxu0 0.0
    %379 = vmatpush1.msra.mxu0 0.0
    %380 = vmatprep.subr.mxu0 0.0
    %381 = vmatpush1.msra.mxu0 0.0
    %382 = vmatprep.subr.mxu0 0.0
    %383 = vmatpush1.msra.mxu0 0.0
    %384 = vmatprep.subr.mxu0 0.0
    %385 = vmatpush1.msra.mxu0 0.0
    %386 = vmatprep.subr.mxu0 0.0
    %387 = vmatpush1.msra.mxu0 0.0
    %388 = vmatprep.subr.mxu0 0.0
    %389 = vmatpush1.msra.mxu0 0.0
    %390 = vmatprep.subr.mxu0 0.0
    %391 = vmatpush1.msra.mxu0 0.0
    %392 = vmatprep.subr.mxu0 0.0
    %393 = vmatpush1.msra.mxu0 0.0
    %394 = vmatprep.subr.mxu0 0.0
    %395 = vmatpush1.msra.mxu0 0.0
    %396 = vmatprep.subr.mxu0 0.0
    %397 = vmatpush1.msra.mxu0 0.0
    %398 = vmatprep.subr.mxu0 0.0
    %399 = vmatpush1.msra.mxu0 0.0
    %400 = vmatprep.subr.mxu0 0.0
    %401 = vmatpush1.msra.mxu0 0.0
    %402 = vmatprep.subr.mxu0 0.0
    %403 = vmatpush1.msra.mxu0 0.0
    %404 = vmatprep.subr.mxu0 0.0
    %405 = vmatpush1.msra.mxu0 0.0
    %406 = vmatprep.subr.mxu0 0.0
    %407 = vmatpush1.msra.mxu0 0.0
    %408 = vmatprep.subr.mxu0 0.0
    %409 = vmatpush1.msra.mxu0 0.0
    %410 = vmatprep.subr.mxu0 0.0
    %411 = vmatpush1.msra.mxu0 0.0
    %412 = vmatprep.subr.mxu0 0.0
    %413 = vmatpush1.msra.mxu0 0.0
    %414 = vmatprep.mubr.f32.mxu0 0.0
    %415 = vmatmul.mubr.f32.gmra.mrb[0].mxu0 %v348
    %v416 = vpop.f32.mrb[0].mxu0
    %v417 = vadd.f32 %v344, %v416
    %v418 = vpop.f32.mrb[0].mxu0
    %419 = vdwg.mxu0
    %v420 = vadd.f32 %v417, %v222
    %v421 = vxor.u32 %v420, 2147483648
    %v422 = vmul.f32 %v421, 1.442695
    %v423 = vpow.pop %v422
    %v424 = vadd.f32 %v423, 1.0
    %v425 = vrcp.pop %v424
    %v426 = vmul.f32 1.0, %v425
    %v427 = vtanh.pop %v420
    %429 = vrot.lane.b32.xlu0 %v269, 32
    %v430 = vpop.permute.xlu0 %429
    %v432 = vmul.f32 %v426, %v430
    %434 = vrot.lane.b32.xlu0 %v427, 32
    %v435 = vpop.permute.xlu0 %434
    %v437 = vmul.f32 %v426, %v435
    %439 = vrot.lane.b32.xlu0 %v437, 32
    %v440 = vpop.permute.xlu0 %439
    %v442 = vadd.f32 %v432, %v440
    %v443 = vtanh.pop %v442
    %445 = vrot.lane.b32.xlu0 %v443, 32
    %v446 = vpop.permute.xlu0 %445
    %v448 = vmul.f32 %v426, %v446
    %s449 = scalar_lea.vmem %s1, 2
    %v450 = vld [vmem:[%s449] sm:$0x3]
    %vm451 = vcmp.ne.f32.partialorder %v450, 0.0
    %v452 = vsel %vm451, 1, 0
    %453 = vset.pattern.permute.xlu0 0
    %454 = vperm.xlu0 %453, %v452
    %v455 = vpop.permute.xlu0 %454
    %vm456 = vcmp.eq.s32.totalorder %v455, 1
    %458 = vrot.lane.b32.xlu0 %v448, 64
    %v459 = vpop.permute.xlu0 %458
    %v461 = vsel %vm456, %v264, %v459
    %463 = vrot.lane.b32.xlu0 %v442, 96
    %v464 = vpop.permute.xlu0 %463
    %v466 = vsel %vm456, %v269, %v464
    %s467 = scalar_lea.vmem [#allocation7], 2
    %468 = vst.msk [vmem:[%s467] sm:$0x3] %vm270, %v461
    %s469 = scalar_lea.vmem %s0, 4
    %v470 = vld [vmem:[%s469] sm:$0x3]
    %v472 = vsel %vm71, %v461, 0
    %474 = vmatprep.subr.mxu0 0.0
    %475 = vmatpush1.msra.mxu0 %v63
    %476 = vmatprep.subr.mxu0 0.0
    %477 = vmatpush1.msra.mxu0 %v64
    %478 = vmatprep.subr.mxu0 0.0
    %479 = vmatpush1.msra.mxu0 %v65
    %480 = vmatprep.subr.mxu0 0.0
    %481 = vmatpush1.msra.mxu0 %v66
    %482 = vmatprep.subr.mxu0 0.0
    %483 = vmatpush1.msra.mxu0 0.0
    %484 = vmatprep.subr.mxu0 0.0
    %485 = vmatpush1.msra.mxu0 0.0
    %486 = vmatprep.subr.mxu0 0.0
    %487 = vmatpush1.msra.mxu0 0.0
    %488 = vmatprep.subr.mxu0 0.0
    %489 = vmatpush1.msra.mxu0 0.0
    %490 = vmatprep.subr.mxu0 0.0
    %491 = vmatpush1.msra.mxu0 0.0
    %492 = vmatprep.subr.mxu0 0.0
    %493 = vmatpush1.msra.mxu0 0.0
    %494 = vmatprep.subr.mxu0 0.0
    %495 = vmatpush1.msra.mxu0 0.0
    %496 = vmatprep.subr.mxu0 0.0
    %497 = vmatpush1.msra.mxu0 0.0
    %498 = vmatprep.subr.mxu0 0.0
    %499 = vmatpush1.msra.mxu0 0.0
    %500 = vmatprep.subr.mxu0 0.0
    %501 = vmatpush1.msra.mxu0 0.0
    %502 = vmatprep.subr.mxu0 0.0
    %503 = vmatpush1.msra.mxu0 0.0
    %504 = vmatprep.subr.mxu0 0.0
    %505 = vmatpush1.msra.mxu0 0.0
    %506 = vmatprep.subr.mxu0 0.0
    %507 = vmatpush1.msra.mxu0 0.0
    %508 = vmatprep.subr.mxu0 0.0
    %509 = vmatpush1.msra.mxu0 0.0
    %510 = vmatprep.subr.mxu0 0.0
    %511 = vmatpush1.msra.mxu0 0.0
    %512 = vmatprep.subr.mxu0 0.0
    %513 = vmatpush1.msra.mxu0 0.0
    %514 = vmatprep.subr.mxu0 0.0
    %515 = vmatpush1.msra.mxu0 0.0
    %516 = vmatprep.subr.mxu0 0.0
    %517 = vmatpush1.msra.mxu0 0.0
    %518 = vmatprep.subr.mxu0 0.0
    %519 = vmatpush1.msra.mxu0 0.0
    %520 = vmatprep.subr.mxu0 0.0
    %521 = vmatpush1.msra.mxu0 0.0
    %522 = vmatprep.subr.mxu0 0.0
    %523 = vmatpush1.msra.mxu0 0.0
    %524 = vmatprep.subr.mxu0 0.0
    %525 = vmatpush1.msra.mxu0 0.0
    %526 = vmatprep.subr.mxu0 0.0
    %527 = vmatpush1.msra.mxu0 0.0
    %528 = vmatprep.subr.mxu0 0.0
    %529 = vmatpush1.msra.mxu0 0.0
    %530 = vmatprep.subr.mxu0 0.0
    %531 = vmatpush1.msra.mxu0 0.0
    %532 = vmatprep.subr.mxu0 0.0
    %533 = vmatpush1.msra.mxu0 0.0
    %534 = vmatprep.subr.mxu0 0.0
    %535 = vmatpush1.msra.mxu0 0.0
    %536 = vmatprep.subr.mxu0 0.0
    %537 = vmatpush1.msra.mxu0 0.0
    %538 = vmatprep.mubr.f32.mxu0 0.0
    %539 = vmatmul.mubr.f32.gmra.mrb[0].mxu0 %v472
    %v540 = vpop.f32.mrb[0].mxu0
    %v541 = vadd.f32 0.0, %v540
    %v542 = vpop.f32.mrb[0].mxu0
    %543 = vdwg.mxu0
    %v545 = vsel %vm71, %v470, 0
    %547 = vmatprep.subr.mxu0 0.0
    %548 = vmatpush1.msra.mxu0 %v59
    %549 = vmatprep.subr.mxu0 0.0
    %550 = vmatpush1.msra.mxu0 %v60
    %551 = vmatprep.subr.mxu0 0.0
    %552 = vmatpush1.msra.mxu0 %v61
    %553 = vmatprep.subr.mxu0 0.0
    %554 = vmatpush1.msra.mxu0 %v62
    %555 = vmatprep.subr.mxu0 0.0
    %556 = vmatpush1.msra.mxu0 0.0
    %557 = vmatprep.subr.mxu0 0.0
    %558 = vmatpush1.msra.mxu0 0.0
    %559 = vmatprep.subr.mxu0 0.0
    %560 = vmatpush1.msra.mxu0 0.0
    %561 = vmatprep.subr.mxu0 0.0
    %562 = vmatpush1.msra.mxu0 0.0
    %563 = vmatprep.subr.mxu0 0.0
    %564 = vmatpush1.msra.mxu0 0.0
    %565 = vmatprep.subr.mxu0 0.0
    %566 = vmatpush1.msra.mxu0 0.0
    %567 = vmatprep.subr.mxu0 0.0
    %568 = vmatpush1.msra.mxu0 0.0
    %569 = vmatprep.subr.mxu0 0.0
    %570 = vmatpush1.msra.mxu0 0.0
    %571 = vmatprep.subr.mxu0 0.0
    %572 = vmatpush1.msra.mxu0 0.0
    %573 = vmatprep.subr.mxu0 0.0
    %574 = vmatpush1.msra.mxu0 0.0
    %575 = vmatprep.subr.mxu0 0.0
    %576 = vmatpush1.msra.mxu0 0.0
    %577 = vmatprep.subr.mxu0 0.0
    %578 = vmatpush1.msra.mxu0 0.0
    %579 = vmatprep.subr.mxu0 0.0
    %580 = vmatpush1.msra.mxu0 0.0
    %581 = vmatprep.subr.mxu0 0.0
    %582 = vmatpush1.msra.mxu0 0.0
    %583 = vmatprep.subr.mxu0 0.0
    %584 = vmatpush1.msra.mxu0 0.0
    %585 = vmatprep.subr.mxu0 0.0
    %586 = vmatpush1.msra.mxu0 0.0
    %587 = vmatprep.subr.mxu0 0.0
    %588 = vmatpush1.msra.mxu0 0.0
    %589 = vmatprep.subr.mxu0 0.0
    %590 = vmatpush1.msra.mxu0 0.0
    %591 = vmatprep.subr.mxu0 0.0
    %592 = vmatpush1.msra.mxu0 0.0
    %593 = vmatprep.subr.mxu0 0.0
    %594 = vmatpush1.msra.mxu0 0.0
    %595 = vmatprep.subr.mxu0 0.0
    %596 = vmatpush1.msra.mxu0 0.0
    %597 = vmatprep.subr.mxu0 0.0
    %598 = vmatpush1.msra.mxu0 0.0
    %599 = vmatprep.subr.mxu0 0.0
    %600 = vmatpush1.msra.mxu0 0.0
    %601 = vmatprep.subr.mxu0 0.0
    %602 = vmatpush1.msra.mxu0 0.0
    %603 = vmatprep.subr.mxu0 0.0
    %604 = vmatpush1.msra.mxu0 0.0
    %605 = vmatprep.subr.mxu0 0.0
    %606 = vmatpush1.msra.mxu0 0.0
    %607 = vmatprep.subr.mxu0 0.0
    %608 = vmatpush1.msra.mxu0 0.0
    %609 = vmatprep.subr.mxu0 0.0
    %610 = vmatpush1.msra.mxu0 0.0
    %611 = vmatprep.mubr.f32.mxu0 0.0
    %612 = vmatmul.mubr.f32.gmra.mrb[0].mxu0 %v545
    %v613 = vpop.f32.mrb[0].mxu0
    %v614 = vadd.f32 %v541, %v613
    %v615 = vpop.f32.mrb[0].mxu0
    %616 = vdwg.mxu0
    %v617 = vadd.f32 %v614, %v222
    %v618 = vxor.u32 %v617, 2147483648
    %v619 = vmul.f32 %v618, 1.442695
    %v620 = vpow.pop %v619
    %v621 = vadd.f32 %v620, 1.0
    %v622 = vrcp.pop %v621
    %v623 = vmul.f32 1.0, %v622
    %v624 = vtanh.pop %v617
    %626 = vrot.lane.b32.xlu0 %v466, 32
    %v627 = vpop.permute.xlu0 %626
    %v629 = vmul.f32 %v623, %v627
    %631 = vrot.lane.b32.xlu0 %v624, 32
    %v632 = vpop.permute.xlu0 %631
    %v634 = vmul.f32 %v623, %v632
    %636 = vrot.lane.b32.xlu0 %v634, 32
    %v637 = vpop.permute.xlu0 %636
    %v639 = vadd.f32 %v629, %v637
    %v640 = vtanh.pop %v639
    %642 = vrot.lane.b32.xlu0 %v640, 32
    %v643 = vpop.permute.xlu0 %642
    %v645 = vmul.f32 %v623, %v643
    %s646 = scalar_lea.vmem %s1, 4
    %v647 = vld [vmem:[%s646] sm:$0x3]
    %vm648 = vcmp.ne.f32.partialorder %v647, 0.0
    %v649 = vsel %vm648, 1, 0
    %650 = vset.pattern.permute.xlu0 0
    %651 = vperm.xlu0 %650, %v649
    %v652 = vpop.permute.xlu0 %651
    %vm653 = vcmp.eq.s32.totalorder %v652, 1
    %655 = vrot.lane.b32.xlu0 %v645, 64
    %v656 = vpop.permute.xlu0 %655
    %v658 = vsel %vm653, %v461, %v656
    %660 = vrot.lane.b32.xlu0 %v639, 96
    %v661 = vpop.permute.xlu0 %660
    %v663 = vsel %vm653, %v466, %v661
    %s664 = scalar_lea.vmem [#allocation7], 4
    %665 = vst.msk [vmem:[%s664] sm:$0x3] %vm270, %v658
    %s666 = scalar_lea.vmem %s0, 6
    %v667 = vld [vmem:[%s666] sm:$0x3]
    %v669 = vsel %vm71, %v658, 0
    %671 = vmatprep.subr.mxu0 0.0
    %672 = vmatpush1.msra.mxu0 %v63
    %673 = vmatprep.subr.mxu0 0.0
    %674 = vmatpush1.msra.mxu0 %v64
    %675 = vmatprep.subr.mxu0 0.0
    %676 = vmatpush1.msra.mxu0 %v65
    %677 = vmatprep.subr.mxu0 0.0
    %678 = vmatpush1.msra.mxu0 %v66
    %679 = vmatprep.subr.mxu0 0.0
    %680 = vmatpush1.msra.mxu0 0.0
    %681 = vmatprep.subr.mxu0 0.0
    %682 = vmatpush1.msra.mxu0 0.0
    %683 = vmatprep.subr.mxu0 0.0
    %684 = vmatpush1.msra.mxu0 0.0
    %685 = vmatprep.subr.mxu0 0.0
    %686 = vmatpush1.msra.mxu0 0.0
    %687 = vmatprep.subr.mxu0 0.0
    %688 = vmatpush1.msra.mxu0 0.0
    %689 = vmatprep.subr.mxu0 0.0
    %690 = vmatpush1.msra.mxu0 0.0
    %691 = vmatprep.subr.mxu0 0.0
    %692 = vmatpush1.msra.mxu0 0.0
    %693 = vmatprep.subr.mxu0 0.0
    %694 = vmatpush1.msra.mxu0 0.0
    %695 = vmatprep.subr.mxu0 0.0
    %696 = vmatpush1.msra.mxu0 0.0
    %697 = vmatprep.subr.mxu0 0.0
    %698 = vmatpush1.msra.mxu0 0.0
    %699 = vmatprep.subr.mxu0 0.0
    %700 = vmatpush1.msra.mxu0 0.0
    %701 = vmatprep.subr.mxu0 0.0
    %702 = vmatpush1.msra.mxu0 0.0
    %703 = vmatprep.subr.mxu0 0.0
    %704 = vmatpush1.msra.mxu0 0.0
    %705 = vmatprep.subr.mxu0 0.0
    %706 = vmatpush1.msra.mxu0 0.0
    %707 = vmatprep.subr.mxu0 0.0
    %708 = vmatpush1.msra.mxu0 0.0
    %709 = vmatprep.subr.mxu0 0.0
    %710 = vmatpush1.msra.mxu0 0.0
    %711 = vmatprep.subr.mxu0 0.0
    %712 = vmatpush1.msra.mxu0 0.0
    %713 = vmatprep.subr.mxu0 0.0
    %714 = vmatpush1.msra.mxu0 0.0
    %715 = vmatprep.subr.mxu0 0.0
    %716 = vmatpush1.msra.mxu0 0.0
    %717 = vmatprep.subr.mxu0 0.0
    %718 = vmatpush1.msra.mxu0 0.0
    %719 = vmatprep.subr.mxu0 0.0
    %720 = vmatpush1.msra.mxu0 0.0
    %721 = vmatprep.subr.mxu0 0.0
    %722 = vmatpush1.msra.mxu0 0.0
    %723 = vmatprep.subr.mxu0 0.0
    %724 = vmatpush1.msra.mxu0 0.0
    %725 = vmatprep.subr.mxu0 0.0
    %726 = vmatpush1.msra.mxu0 0.0
    %727 = vmatprep.subr.mxu0 0.0
    %728 = vmatpush1.msra.mxu0 0.0
    %729 = vmatprep.subr.mxu0 0.0
    %730 = vmatpush1.msra.mxu0 0.0
    %731 = vmatprep.subr.mxu0 0.0
    %732 = vmatpush1.msra.mxu0 0.0
    %733 = vmatprep.subr.mxu0 0.0
    %734 = vmatpush1.msra.mxu0 0.0
    %735 = vmatprep.mubr.f32.mxu0 0.0
    %736 = vmatmul.mubr.f32.gmra.mrb[0].mxu0 %v669
    %v737 = vpop.f32.mrb[0].mxu0
    %v738 = vadd.f32 0.0, %v737
    %v739 = vpop.f32.mrb[0].mxu0
    %740 = vdwg.mxu0
    %v742 = vsel %vm71, %v667, 0
    %744 = vmatprep.subr.mxu0 0.0
    %745 = vmatpush1.msra.mxu0 %v59
    %746 = vmatprep.subr.mxu0 0.0
    %747 = vmatpush1.msra.mxu0 %v60
    %748 = vmatprep.subr.mxu0 0.0
    %749 = vmatpush1.msra.mxu0 %v61
    %750 = vmatprep.subr.mxu0 0.0
    %751 = vmatpush1.msra.mxu0 %v62
    %752 = vmatprep.subr.mxu0 0.0
    %753 = vmatpush1.msra.mxu0 0.0
    %754 = vmatprep.subr.mxu0 0.0
    %755 = vmatpush1.msra.mxu0 0.0
    %756 = vmatprep.subr.mxu0 0.0
    %757 = vmatpush1.msra.mxu0 0.0
    %758 = vmatprep.subr.mxu0 0.0
    %759 = vmatpush1.msra.mxu0 0.0
    %760 = vmatprep.subr.mxu0 0.0
    %761 = vmatpush1.msra.mxu0 0.0
    %762 = vmatprep.subr.mxu0 0.0
    %763 = vmatpush1.msra.mxu0 0.0
    %764 = vmatprep.subr.mxu0 0.0
    %765 = vmatpush1.msra.mxu0 0.0
    %766 = vmatprep.subr.mxu0 0.0
    %767 = vmatpush1.msra.mxu0 0.0
    %768 = vmatprep.subr.mxu0 0.0
    %769 = vmatpush1.msra.mxu0 0.0
    %770 = vmatprep.subr.mxu0 0.0
    %771 = vmatpush1.msra.mxu0 0.0
    %772 = vmatprep.subr.mxu0 0.0
    %773 = vmatpush1.msra.mxu0 0.0
    %774 = vmatprep.subr.mxu0 0.0
    %775 = vmatpush1.msra.mxu0 0.0
    %776 = vmatprep.subr.mxu0 0.0
    %777 = vmatpush1.msra.mxu0 0.0
    %778 = vmatprep.subr.mxu0 0.0
    %779 = vmatpush1.msra.mxu0 0.0
    %780 = vmatprep.subr.mxu0 0.0
    %781 = vmatpush1.msra.mxu0 0.0
    %782 = vmatprep.subr.mxu0 0.0
    %783 = vmatpush1.msra.mxu0 0.0
    %784 = vmatprep.subr.mxu0 0.0
    %785 = vmatpush1.msra.mxu0 0.0
    %786 = vmatprep.subr.mxu0 0.0
    %787 = vmatpush1.msra.mxu0 0.0
    %788 = vmatprep.subr.mxu0 0.0
    %789 = vmatpush1.msra.mxu0 0.0
    %790 = vmatprep.subr.mxu0 0.0
    %791 = vmatpush1.msra.mxu0 0.0
    %792 = vmatprep.subr.mxu0 0.0
    %793 = vmatpush1.msra.mxu0 0.0
    %794 = vmatprep.subr.mxu0 0.0
    %795 = vmatpush1.msra.mxu0 0.0
    %796 = vmatprep.subr.mxu0 0.0
    %797 = vmatpush1.msra.mxu0 0.0
    %798 = vmatprep.subr.mxu0 0.0
    %799 = vmatpush1.msra.mxu0 0.0
    %800 = vmatprep.subr.mxu0 0.0
    %801 = vmatpush1.msra.mxu0 0.0
    %802 = vmatprep.subr.mxu0 0.0
    %803 = vmatpush1.msra.mxu0 0.0
    %804 = vmatprep.subr.mxu0 0.0
    %805 = vmatpush1.msra.mxu0 0.0
    %806 = vmatprep.subr.mxu0 0.0
    %807 = vmatpush1.msra.mxu0 0.0
    %808 = vmatprep.mubr.f32.mxu0 0.0
    %809 = vmatmul.mubr.f32.gmra.mrb[0].mxu0 %v742
    %v810 = vpop.f32.mrb[0].mxu0
    %v811 = vadd.f32 %v738, %v810
    %v812 = vpop.f32.mrb[0].mxu0
    %813 = vdwg.mxu0
    %v814 = vadd.f32 %v811, %v222
    %v815 = vxor.u32 %v814, 2147483648
    %v816 = vmul.f32 %v815, 1.442695
    %v817 = vpow.pop %v816
    %v818 = vadd.f32 %v817, 1.0
    %v819 = vrcp.pop %v818
    %v820 = vmul.f32 1.0, %v819
    %v821 = vtanh.pop %v814
    %823 = vrot.lane.b32.xlu0 %v663, 32
    %v824 = vpop.permute.xlu0 %823
    %v826 = vmul.f32 %v820, %v824
    %828 = vrot.lane.b32.xlu0 %v821, 32
    %v829 = vpop.permute.xlu0 %828
    %v831 = vmul.f32 %v820, %v829
    %833 = vrot.lane.b32.xlu0 %v831, 32
    %v834 = vpop.permute.xlu0 %833
    %v836 = vadd.f32 %v826, %v834
    %v837 = vtanh.pop %v836
    %839 = vrot.lane.b32.xlu0 %v837, 32
    %v840 = vpop.permute.xlu0 %839
    %v842 = vmul.f32 %v820, %v840
    %s843 = scalar_lea.vmem %s1, 6
    %v844 = vld [vmem:[%s843] sm:$0x3]
    %vm845 = vcmp.ne.f32.partialorder %v844, 0.0
    %v846 = vsel %vm845, 1, 0
    %847 = vset.pattern.permute.xlu0 0
    %848 = vperm.xlu0 %847, %v846
    %v849 = vpop.permute.xlu0 %848
    %vm850 = vcmp.eq.s32.totalorder %v849, 1
    %852 = vrot.lane.b32.xlu0 %v842, 64
    %v853 = vpop.permute.xlu0 %852
    %v855 = vsel %vm850, %v658, %v853
    %857 = vrot.lane.b32.xlu0 %v836, 96
    %v858 = vpop.permute.xlu0 %857
    %v860 = vsel %vm850, %v663, %v858
    %s861 = scalar_lea.vmem [#allocation7], 6
    %862 = vst.msk [vmem:[%s861] sm:$0x3] %vm270, %v855
    %s863 = scalar_lea.vmem %s0, 8
    %v864 = vld [vmem:[%s863] sm:$0x3]
    %v866 = vsel %vm71, %v855, 0
    %868 = vmatprep.subr.mxu0 0.0
    %869 = vmatpush1.msra.mxu0 %v63
    %870 = vmatprep.subr.mxu0 0.0
    %871 = vmatpush1.msra.mxu0 %v64
    %872 = vmatprep.subr.mxu0 0.0
    %873 = vmatpush1.msra.mxu0 %v65
    %874 = vmatprep.subr.mxu0 0.0
    %875 = vmatpush1.msra.mxu0 %v66
    %876 = vmatprep.subr.mxu0 0.0
    %877 = vmatpush1.msra.mxu0 0.0
    %878 = vmatprep.subr.mxu0 0.0
    %879 = vmatpush1.msra.mxu0 0.0
    %880 = vmatprep.subr.mxu0 0.0
    %881 = vmatpush1.msra.mxu0 0.0
    %882 = vmatprep.subr.mxu0 0.0
    %883 = vmatpush1.msra.mxu0 0.0
    %884 = vmatprep.subr.mxu0 0.0
    %885 = vmatpush1.msra.mxu0 0.0
    %886 = vmatprep.subr.mxu0 0.0
    %887 = vmatpush1.msra.mxu0 0.0
    %888 = vmatprep.subr.mxu0 0.0
    %889 = vmatpush1.msra.mxu0 0.0
    %890 = vmatprep.subr.mxu0 0.0
    %891 = vmatpush1.msra.mxu0 0.0
    %892 = vmatprep.subr.mxu0 0.0
    %893 = vmatpush1.msra.mxu0 0.0
    %894 = vmatprep.subr.mxu0 0.0
    %895 = vmatpush1.msra.mxu0 0.0
    %896 = vmatprep.subr.mxu0 0.0
    %897 = vmatpush1.msra.mxu0 0.0
    %898 = vmatprep.subr.mxu0 0.0
    %899 = vmatpush1.msra.mxu0 0.0
    %900 = vmatprep.subr.mxu0 0.0
    %901 = vmatpush1.msra.mxu0 0.0
    %902 = vmatprep.subr.mxu0 0.0
    %903 = vmatpush1.msra.mxu0 0.0
    %904 = vmatprep.subr.mxu0 0.0
    %905 = vmatpush1.msra.mxu0 0.0
    %906 = vmatprep.subr.mxu0 0.0
    %907 = vmatpush1.msra.mxu0 0.0
    %908 = vmatprep.subr.mxu0 0.0
    %909 = vmatpush1.msra.mxu0 0.0
    %910 = vmatprep.subr.mxu0 0.0
    %911 = vmatpush1.msra.mxu0 0.0
    %912 = vmatprep.subr.mxu0 0.0
    %913 = vmatpush1.msra.mxu0 0.0
    %914 = vmatprep.subr.mxu0 0.0
    %915 = vmatpush1.msra.mxu0 0.0
    %916 = vmatprep.subr.mxu0 0.0
    %917 = vmatpush1.msra.mxu0 0.0
    %918 = vmatprep.subr.mxu0 0.0
    %919 = vmatpush1.msra.mxu0 0.0
    %920 = vmatprep.subr.mxu0 0.0
    %921 = vmatpush1.msra.mxu0 0.0
    %922 = vmatprep.subr.mxu0 0.0
    %923 = vmatpush1.msra.mxu0 0.0
    %924 = vmatprep.subr.mxu0 0.0
    %925 = vmatpush1.msra.mxu0 0.0
    %926 = vmatprep.subr.mxu0 0.0
    %927 = vmatpush1.msra.mxu0 0.0
    %928 = vmatprep.subr.mxu0 0.0
    %929 = vmatpush1.msra.mxu0 0.0
    %930 = vmatprep.subr.mxu0 0.0
    %931 = vmatpush1.msra.mxu0 0.0
    %932 = vmatprep.mubr.f32.mxu0 0.0
    %933 = vmatmul.mubr.f32.gmra.mrb[0].mxu0 %v866
    %v934 = vpop.f32.mrb[0].mxu0
    %v935 = vadd.f32 0.0, %v934
    %v936 = vpop.f32.mrb[0].mxu0
    %937 = vdwg.mxu0
    %v939 = vsel %vm71, %v864, 0
    %941 = vmatprep.subr.mxu0 0.0
    %942 = vmatpush1.msra.mxu0 %v59
    %943 = vmatprep.subr.mxu0 0.0
    %944 = vmatpush1.msra.mxu0 %v60
    %945 = vmatprep.subr.mxu0 0.0
    %946 = vmatpush1.msra.mxu0 %v61
    %947 = vmatprep.subr.mxu0 0.0
    %948 = vmatpush1.msra.mxu0 %v62
    %949 = vmatprep.subr.mxu0 0.0
    %950 = vmatpush1.msra.mxu0 0.0
    %951 = vmatprep.subr.mxu0 0.0
    %952 = vmatpush1.msra.mxu0 0.0
    %953 = vmatprep.subr.mxu0 0.0
    %954 = vmatpush1.msra.mxu0 0.0
    %955 = vmatprep.subr.mxu0 0.0
    %956 = vmatpush1.msra.mxu0 0.0
    %957 = vmatprep.subr.mxu0 0.0
    %958 = vmatpush1.msra.mxu0 0.0
    %959 = vmatprep.subr.mxu0 0.0
    %960 = vmatpush1.msra.mxu0 0.0
    %961 = vmatprep.subr.mxu0 0.0
    %962 = vmatpush1.msra.mxu0 0.0
    %963 = vmatprep.subr.mxu0 0.0
    %964 = vmatpush1.msra.mxu0 0.0
    %965 = vmatprep.subr.mxu0 0.0
    %966 = vmatpush1.msra.mxu0 0.0
    %967 = vmatprep.subr.mxu0 0.0
    %968 = vmatpush1.msra.mxu0 0.0
    %969 = vmatprep.subr.mxu0 0.0
    %970 = vmatpush1.msra.mxu0 0.0
    %971 = vmatprep.subr.mxu0 0.0
    %972 = vmatpush1.msra.mxu0 0.0
    %973 = vmatprep.subr.mxu0 0.0
    %974 = vmatpush1.msra.mxu0 0.0
    %975 = vmatprep.subr.mxu0 0.0
    %976 = vmatpush1.msra.mxu0 0.0
    %977 = vmatprep.subr.mxu0 0.0
    %978 = vmatpush1.msra.mxu0 0.0
    %979 = vmatprep.subr.mxu0 0.0
    %980 = vmatpush1.msra.mxu0 0.0
    %981 = vmatprep.subr.mxu0 0.0
    %982 = vmatpush1.msra.mxu0 0.0
    %983 = vmatprep.subr.mxu0 0.0
    %984 = vmatpush1.msra.mxu0 0.0
    %985 = vmatprep.subr.mxu0 0.0
    %986 = vmatpush1.msra.mxu0 0.0
    %987 = vmatprep.subr.mxu0 0.0
    %988 = vmatpush1.msra.mxu0 0.0
    %989 = vmatprep.subr.mxu0 0.0
    %990 = vmatpush1.msra.mxu0 0.0
    %991 = vmatprep.subr.mxu0 0.0
    %992 = vmatpush1.msra.mxu0 0.0
    %993 = vmatprep.subr.mxu0 0.0
    %994 = vmatpush1.msra.mxu0 0.0
    %995 = vmatprep.subr.mxu0 0.0
    %996 = vmatpush1.msra.mxu0 0.0
    %997 = vmatprep.subr.mxu0 0.0
    %998 = vmatpush1.msra.mxu0 0.0
    %999 = vmatprep.subr.mxu0 0.0
    %1000 = vmatpush1.msra.mxu0 0.0
    %1001 = vmatprep.subr.mxu0 0.0
    %1002 = vmatpush1.msra.mxu0 0.0
    %1003 = vmatprep.subr.mxu0 0.0
    %1004 = vmatpush1.msra.mxu0 0.0
    %1005 = vmatprep.mubr.f32.mxu0 0.0
    %1006 = vmatmul.mubr.f32.gmra.mrb[0].mxu0 %v939
    %v1007 = vpop.f32.mrb[0].mxu0
    %v1008 = vadd.f32 %v935, %v1007
    %v1009 = vpop.f32.mrb[0].mxu0
    %1010 = vdwg.mxu0
    %v1011 = vadd.f32 %v1008, %v222
    %v1012 = vxor.u32 %v1011, 2147483648
    %v1013 = vmul.f32 %v1012, 1.442695
    %v1014 = vpow.pop %v1013
    %v1015 = vadd.f32 %v1014, 1.0
    %v1016 = vrcp.pop %v1015
    %v1017 = vmul.f32 1.0, %v1016
    %v1018 = vtanh.pop %v1011
    %1020 = vrot.lane.b32.xlu0 %v860, 32
    %v1021 = vpop.permute.xlu0 %1020
    %v1023 = vmul.f32 %v1017, %v1021
    %1025 = vrot.lane.b32.xlu0 %v1018, 32
    %v1026 = vpop.permute.xlu0 %1025
    %v1028 = vmul.f32 %v1017, %v1026
    %1030 = vrot.lane.b32.xlu0 %v1028, 32
    %v1031 = vpop.permute.xlu0 %1030
    %v1033 = vadd.f32 %v1023, %v1031
    %v1034 = vtanh.pop %v1033
    %1036 = vrot.lane.b32.xlu0 %v1034, 32
    %v1037 = vpop.permute.xlu0 %1036
    %v1039 = vmul.f32 %v1017, %v1037
    %s1040 = scalar_lea.vmem %s1, 8
    %v1041 = vld [vmem:[%s1040] sm:$0x3]
    %vm1042 = vcmp.ne.f32.partialorder %v1041, 0.0
    %v1043 = vsel %vm1042, 1, 0
    %1044 = vset.pattern.permute.xlu0 0
    %1045 = vperm.xlu0 %1044, %v1043
    %v1046 = vpop.permute.xlu0 %1045
    %vm1047 = vcmp.eq.s32.totalorder %v1046, 1
    %1049 = vrot.lane.b32.xlu0 %v1039, 64
    %v1050 = vpop.permute.xlu0 %1049
    %v1052 = vsel %vm1047, %v855, %v1050
    %1054 = vrot.lane.b32.xlu0 %v1033, 96
    %v1055 = vpop.permute.xlu0 %1054
    %v1057 = vsel %vm1047, %v860, %v1055
    %s1058 = scalar_lea.vmem [#allocation7], 8
    %1059 = vst.msk [vmem:[%s1058] sm:$0x3] %vm270, %v1052
    %s1060 = scalar_lea.vmem %s0, 10
    %v1061 = vld [vmem:[%s1060] sm:$0x3]
    %v1063 = vsel %vm71, %v1052, 0
    %1065 = vmatprep.subr.mxu0 0.0
    %1066 = vmatpush1.msra.mxu0 %v63
    %1067 = vmatprep.subr.mxu0 0.0
    %1068 = vmatpush1.msra.mxu0 %v64
    %1069 = vmatprep.subr.mxu0 0.0
    %1070 = vmatpush1.msra.mxu0 %v65
    %1071 = vmatprep.subr.mxu0 0.0
    %1072 = vmatpush1.msra.mxu0 %v66
    %1073 = vmatprep.subr.mxu0 0.0
    %1074 = vmatpush1.msra.mxu0 0.0
    %1075 = vmatprep.subr.mxu0 0.0
    %1076 = vmatpush1.msra.mxu0 0.0
    %1077 = vmatprep.subr.mxu0 0.0
    %1078 = vmatpush1.msra.mxu0 0.0
    %1079 = vmatprep.subr.mxu0 0.0
    %1080 = vmatpush1.msra.mxu0 0.0
    %1081 = vmatprep.subr.mxu0 0.0
    %1082 = vmatpush1.msra.mxu0 0.0
    %1083 = vmatprep.subr.mxu0 0.0
    %1084 = vmatpush1.msra.mxu0 0.0
    %1085 = vmatprep.subr.mxu0 0.0
    %1086 = vmatpush1.msra.mxu0 0.0
    %1087 = vmatprep.subr.mxu0 0.0
    %1088 = vmatpush1.msra.mxu0 0.0
    %1089 = vmatprep.subr.mxu0 0.0
    %1090 = vmatpush1.msra.mxu0 0.0
    %1091 = vmatprep.subr.mxu0 0.0
    %1092 = vmatpush1.msra.mxu0 0.0
    %1093 = vmatprep.subr.mxu0 0.0
    %1094 = vmatpush1.msra.mxu0 0.0
    %1095 = vmatprep.subr.mxu0 0.0
    %1096 = vmatpush1.msra.mxu0 0.0
    %1097 = vmatprep.subr.mxu0 0.0
    %1098 = vmatpush1.msra.mxu0 0.0
    %1099 = vmatprep.subr.mxu0 0.0
    %1100 = vmatpush1.msra.mxu0 0.0
    %1101 = vmatprep.subr.mxu0 0.0
    %1102 = vmatpush1.msra.mxu0 0.0
    %1103 = vmatprep.subr.mxu0 0.0
    %1104 = vmatpush1.msra.mxu0 0.0
    %1105 = vmatprep.subr.mxu0 0.0
    %1106 = vmatpush1.msra.mxu0 0.0
    %1107 = vmatprep.subr.mxu0 0.0
    %1108 = vmatpush1.msra.mxu0 0.0
    %1109 = vmatprep.subr.mxu0 0.0
    %1110 = vmatpush1.msra.mxu0 0.0
    %1111 = vmatprep.subr.mxu0 0.0
    %1112 = vmatpush1.msra.mxu0 0.0
    %1113 = vmatprep.subr.mxu0 0.0
    %1114 = vmatpush1.msra.mxu0 0.0
    %1115 = vmatprep.subr.mxu0 0.0
    %1116 = vmatpush1.msra.mxu0 0.0
    %1117 = vmatprep.subr.mxu0 0.0
    %1118 = vmatpush1.msra.mxu0 0.0
    %1119 = vmatprep.subr.mxu0 0.0
    %1120 = vmatpush1.msra.mxu0 0.0
    %1121 = vmatprep.subr.mxu0 0.0
    %1122 = vmatpush1.msra.mxu0 0.0
    %1123 = vmatprep.subr.mxu0 0.0
    %1124 = vmatpush1.msra.mxu0 0.0
    %1125 = vmatprep.subr.mxu0 0.0
    %1126 = vmatpush1.msra.mxu0 0.0
    %1127 = vmatprep.subr.mxu0 0.0
    %1128 = vmatpush1.msra.mxu0 0.0
    %1129 = vmatprep.mubr.f32.mxu0 0.0
    %1130 = vmatmul.mubr.f32.gmra.mrb[0].mxu0 %v1063
    %v1131 = vpop.f32.mrb[0].mxu0
    %v1132 = vadd.f32 0.0, %v1131
    %v1133 = vpop.f32.mrb[0].mxu0
    %1134 = vdwg.mxu0
    %v1136 = vsel %vm71, %v1061, 0
    %1138 = vmatprep.subr.mxu0 0.0
    %1139 = vmatpush1.msra.mxu0 %v59
    %1140 = vmatprep.subr.mxu0 0.0
    %1141 = vmatpush1.msra.mxu0 %v60
    %1142 = vmatprep.subr.mxu0 0.0
    %1143 = vmatpush1.msra.mxu0 %v61
    %1144 = vmatprep.subr.mxu0 0.0
    %1145 = vmatpush1.msra.mxu0 %v62
    %1146 = vmatprep.subr.mxu0 0.0
    %1147 = vmatpush1.msra.mxu0 0.0
    %1148 = vmatprep.subr.mxu0 0.0
    %1149 = vmatpush1.msra.mxu0 0.0
    %1150 = vmatprep.subr.mxu0 0.0
    %1151 = vmatpush1.msra.mxu0 0.0
    %1152 = vmatprep.subr.mxu0 0.0
    %1153 = vmatpush1.msra.mxu0 0.0
    %1154 = vmatprep.subr.mxu0 0.0
    %1155 = vmatpush1.msra.mxu0 0.0
    %1156 = vmatprep.subr.mxu0 0.0
    %1157 = vmatpush1.msra.mxu0 0.0
    %1158 = vmatprep.subr.mxu0 0.0
    %1159 = vmatpush1.msra.mxu0 0.0
    %1160 = vmatprep.subr.mxu0 0.0
    %1161 = vmatpush1.msra.mxu0 0.0
    %1162 = vmatprep.subr.mxu0 0.0
    %1163 = vmatpush1.msra.mxu0 0.0
    %1164 = vmatprep.subr.mxu0 0.0
    %1165 = vmatpush1.msra.mxu0 0.0
    %1166 = vmatprep.subr.mxu0 0.0
    %1167 = vmatpush1.msra.mxu0 0.0
    %1168 = vmatprep.subr.mxu0 0.0
    %1169 = vmatpush1.msra.mxu0 0.0
    %1170 = vmatprep.subr.mxu0 0.0
    %1171 = vmatpush1.msra.mxu0 0.0
    %1172 = vmatprep.subr.mxu0 0.0
    %1173 = vmatpush1.msra.mxu0 0.0
    %1174 = vmatprep.subr.mxu0 0.0
    %1175 = vmatpush1.msra.mxu0 0.0
    %1176 = vmatprep.subr.mxu0 0.0
    %1177 = vmatpush1.msra.mxu0 0.0
    %1178 = vmatprep.subr.mxu0 0.0
    %1179 = vmatpush1.msra.mxu0 0.0
    %1180 = vmatprep.subr.mxu0 0.0
    %1181 = vmatpush1.msra.mxu0 0.0
    %1182 = vmatprep.subr.mxu0 0.0
    %1183 = vmatpush1.msra.mxu0 0.0
    %1184 = vmatprep.subr.mxu0 0.0
    %1185 = vmatpush1.msra.mxu0 0.0
    %1186 = vmatprep.subr.mxu0 0.0
    %1187 = vmatpush1.msra.mxu0 0.0
    %1188 = vmatprep.subr.mxu0 0.0
    %1189 = vmatpush1.msra.mxu0 0.0
    %1190 = vmatprep.subr.mxu0 0.0
    %1191 = vmatpush1.msra.mxu0 0.0
    %1192 = vmatprep.subr.mxu0 0.0
    %1193 = vmatpush1.msra.mxu0 0.0
    %1194 = vmatprep.subr.mxu0 0.0
    %1195 = vmatpush1.msra.mxu0 0.0
    %1196 = vmatprep.subr.mxu0 0.0
    %1197 = vmatpush1.msra.mxu0 0.0
    %1198 = vmatprep.subr.mxu0 0.0
    %1199 = vmatpush1.msra.mxu0 0.0
    %1200 = vmatprep.subr.mxu0 0.0
    %1201 = vmatpush1.msra.mxu0 0.0
    %1202 = vmatprep.mubr.f32.mxu0 0.0
    %1203 = vmatmul.mubr.f32.gmra.mrb[0].mxu0 %v1136
    %v1204 = vpop.f32.mrb[0].mxu0
    %v1205 = vadd.f32 %v1132, %v1204
    %v1206 = vpop.f32.mrb[0].mxu0
    %1207 = vdwg.mxu0
    %v1208 = vadd.f32 %v1205, %v222
    %v1209 = vxor.u32 %v1208, 2147483648
    %v1210 = vmul.f32 %v1209, 1.442695
    %v1211 = vpow.pop %v1210
    %v1212 = vadd.f32 %v1211, 1.0
    %v1213 = vrcp.pop %v1212
    %v1214 = vmul.f32 1.0, %v1213
    %v1215 = vtanh.pop %v1208
    %1217 = vrot.lane.b32.xlu0 %v1057, 32
    %v1218 = vpop.permute.xlu0 %1217
    %v1220 = vmul.f32 %v1214, %v1218
    %1222 = vrot.lane.b32.xlu0 %v1215, 32
    %v1223 = vpop.permute.xlu0 %1222
    %v1225 = vmul.f32 %v1214, %v1223
    %1227 = vrot.lane.b32.xlu0 %v1225, 32
    %v1228 = vpop.permute.xlu0 %1227
    %v1230 = vadd.f32 %v1220, %v1228
    %v1231 = vtanh.pop %v1230
    %1233 = vrot.lane.b32.xlu0 %v1231, 32
    %v1234 = vpop.permute.xlu0 %1233
    %v1236 = vmul.f32 %v1214, %v1234
    %s1237 = scalar_lea.vmem %s1, 10
    %v1238 = vld [vmem:[%s1237] sm:$0x3]
    %vm1239 = vcmp.ne.f32.partialorder %v1238, 0.0
    %v1240 = vsel %vm1239, 1, 0
    %1241 = vset.pattern.permute.xlu0 0
    %1242 = vperm.xlu0 %1241, %v1240
    %v1243 = vpop.permute.xlu0 %1242
    %vm1244 = vcmp.eq.s32.totalorder %v1243, 1
    %1246 = vrot.lane.b32.xlu0 %v1236, 64
    %v1247 = vpop.permute.xlu0 %1246
    %v1249 = vsel %vm1244, %v1052, %v1247
    %1251 = vrot.lane.b32.xlu0 %v1230, 96
    %v1252 = vpop.permute.xlu0 %1251
    %v1254 = vsel %vm1244, %v1057, %v1252
    %s1255 = scalar_lea.vmem [#allocation7], 10
    %1256 = vst.msk [vmem:[%s1255] sm:$0x3] %vm270, %v1249
    %s1257 = scalar_lea.vmem %s0, 12
    %v1258 = vld [vmem:[%s1257] sm:$0x3]
    %v1260 = vsel %vm71, %v1249, 0
    %1262 = vmatprep.subr.mxu0 0.0
    %1263 = vmatpush1.msra.mxu0 %v63
    %1264 = vmatprep.subr.mxu0 0.0
    %1265 = vmatpush1.msra.mxu0 %v64
    %1266 = vmatprep.subr.mxu0 0.0
    %1267 = vmatpush1.msra.mxu0 %v65
    %1268 = vmatprep.subr.mxu0 0.0
    %1269 = vmatpush1.msra.mxu0 %v66
    %1270 = vmatprep.subr.mxu0 0.0
    %1271 = vmatpush1.msra.mxu0 0.0
    %1272 = vmatprep.subr.mxu0 0.0
    %1273 = vmatpush1.msra.mxu0 0.0
    %1274 = vmatprep.subr.mxu0 0.0
    %1275 = vmatpush1.msra.mxu0 0.0
    %1276 = vmatprep.subr.mxu0 0.0
    %1277 = vmatpush1.msra.mxu0 0.0
    %1278 = vmatprep.subr.mxu0 0.0
    %1279 = vmatpush1.msra.mxu0 0.0
    %1280 = vmatprep.subr.mxu0 0.0
    %1281 = vmatpush1.msra.mxu0 0.0
    %1282 = vmatprep.subr.mxu0 0.0
    %1283 = vmatpush1.msra.mxu0 0.0
    %1284 = vmatprep.subr.mxu0 0.0
    %1285 = vmatpush1.msra.mxu0 0.0
    %1286 = vmatprep.subr.mxu0 0.0
    %1287 = vmatpush1.msra.mxu0 0.0
    %1288 = vmatprep.subr.mxu0 0.0
    %1289 = vmatpush1.msra.mxu0 0.0
    %1290 = vmatprep.subr.mxu0 0.0
    %1291 = vmatpush1.msra.mxu0 0.0
    %1292 = vmatprep.subr.mxu0 0.0
    %1293 = vmatpush1.msra.mxu0 0.0
    %1294 = vmatprep.subr.mxu0 0.0
    %1295 = vmatpush1.msra.mxu0 0.0
    %1296 = vmatprep.subr.mxu0 0.0
    %1297 = vmatpush1.msra.mxu0 0.0
    %1298 = vmatprep.subr.mxu0 0.0
    %1299 = vmatpush1.msra.mxu0 0.0
    %1300 = vmatprep.subr.mxu0 0.0
    %1301 = vmatpush1.msra.mxu0 0.0
    %1302 = vmatprep.subr.mxu0 0.0
    %1303 = vmatpush1.msra.mxu0 0.0
    %1304 = vmatprep.subr.mxu0 0.0
    %1305 = vmatpush1.msra.mxu0 0.0
    %1306 = vmatprep.subr.mxu0 0.0
    %1307 = vmatpush1.msra.mxu0 0.0
    %1308 = vmatprep.subr.mxu0 0.0
    %1309 = vmatpush1.msra.mxu0 0.0
    %1310 = vmatprep.subr.mxu0 0.0
    %1311 = vmatpush1.msra.mxu0 0.0
    %1312 = vmatprep.subr.mxu0 0.0
    %1313 = vmatpush1.msra.mxu0 0.0
    %1314 = vmatprep.subr.mxu0 0.0
    %1315 = vmatpush1.msra.mxu0 0.0
    %1316 = vmatprep.subr.mxu0 0.0
    %1317 = vmatpush1.msra.mxu0 0.0
    %1318 = vmatprep.subr.mxu0 0.0
    %1319 = vmatpush1.msra.mxu0 0.0
    %1320 = vmatprep.subr.mxu0 0.0
    %1321 = vmatpush1.msra.mxu0 0.0
    %1322 = vmatprep.subr.mxu0 0.0
    %1323 = vmatpush1.msra.mxu0 0.0
    %1324 = vmatprep.subr.mxu0 0.0
    %1325 = vmatpush1.msra.mxu0 0.0
    %1326 = vmatprep.mubr.f32.mxu0 0.0
    %1327 = vmatmul.mubr.f32.gmra.mrb[0].mxu0 %v1260
    %v1328 = vpop.f32.mrb[0].mxu0
    %v1329 = vadd.f32 0.0, %v1328
    %v1330 = vpop.f32.mrb[0].mxu0
    %1331 = vdwg.mxu0
    %v1333 = vsel %vm71, %v1258, 0
    %1335 = vmatprep.subr.mxu0 0.0
    %1336 = vmatpush1.msra.mxu0 %v59
    %1337 = vmatprep.subr.mxu0 0.0
    %1338 = vmatpush1.msra.mxu0 %v60
    %1339 = vmatprep.subr.mxu0 0.0
    %1340 = vmatpush1.msra.mxu0 %v61
    %1341 = vmatprep.subr.mxu0 0.0
    %1342 = vmatpush1.msra.mxu0 %v62
    %1343 = vmatprep.subr.mxu0 0.0
    %1344 = vmatpush1.msra.mxu0 0.0
    %1345 = vmatprep.subr.mxu0 0.0
    %1346 = vmatpush1.msra.mxu0 0.0
    %1347 = vmatprep.subr.mxu0 0.0
    %1348 = vmatpush1.msra.mxu0 0.0
    %1349 = vmatprep.subr.mxu0 0.0
    %1350 = vmatpush1.msra.mxu0 0.0
    %1351 = vmatprep.subr.mxu0 0.0
    %1352 = vmatpush1.msra.mxu0 0.0
    %1353 = vmatprep.subr.mxu0 0.0
    %1354 = vmatpush1.msra.mxu0 0.0
    %1355 = vmatprep.subr.mxu0 0.0
    %1356 = vmatpush1.msra.mxu0 0.0
    %1357 = vmatprep.subr.mxu0 0.0
    %1358 = vmatpush1.msra.mxu0 0.0
    %1359 = vmatprep.subr.mxu0 0.0
    %1360 = vmatpush1.msra.mxu0 0.0
    %1361 = vmatprep.subr.mxu0 0.0
    %1362 = vmatpush1.msra.mxu0 0.0
    %1363 = vmatprep.subr.mxu0 0.0
    %1364 = vmatpush1.msra.mxu0 0.0
    %1365 = vmatprep.subr.mxu0 0.0
    %1366 = vmatpush1.msra.mxu0 0.0
    %1367 = vmatprep.subr.mxu0 0.0
    %1368 = vmatpush1.msra.mxu0 0.0
    %1369 = vmatprep.subr.mxu0 0.0
    %1370 = vmatpush1.msra.mxu0 0.0
    %1371 = vmatprep.subr.mxu0 0.0
    %1372 = vmatpush1.msra.mxu0 0.0
    %1373 = vmatprep.subr.mxu0 0.0
    %1374 = vmatpush1.msra.mxu0 0.0
    %1375 = vmatprep.subr.mxu0 0.0
    %1376 = vmatpush1.msra.mxu0 0.0
    %1377 = vmatprep.subr.mxu0 0.0
    %1378 = vmatpush1.msra.mxu0 0.0
    %1379 = vmatprep.subr.mxu0 0.0
    %1380 = vmatpush1.msra.mxu0 0.0
    %1381 = vmatprep.subr.mxu0 0.0
    %1382 = vmatpush1.msra.mxu0 0.0
    %1383 = vmatprep.subr.mxu0 0.0
    %1384 = vmatpush1.msra.mxu0 0.0
    %1385 = vmatprep.subr.mxu0 0.0
    %1386 = vmatpush1.msra.mxu0 0.0
    %1387 = vmatprep.subr.mxu0 0.0
    %1388 = vmatpush1.msra.mxu0 0.0
    %1389 = vmatprep.subr.mxu0 0.0
    %1390 = vmatpush1.msra.mxu0 0.0
    %1391 = vmatprep.subr.mxu0 0.0
    %1392 = vmatpush1.msra.mxu0 0.0
    %1393 = vmatprep.subr.mxu0 0.0
    %1394 = vmatpush1.msra.mxu0 0.0
    %1395 = vmatprep.subr.mxu0 0.0
    %1396 = vmatpush1.msra.mxu0 0.0
    %1397 = vmatprep.subr.mxu0 0.0
    %1398 = vmatpush1.msra.mxu0 0.0
    %1399 = vmatprep.mubr.f32.mxu0 0.0
    %1400 = vmatmul.mubr.f32.gmra.mrb[0].mxu0 %v1333
    %v1401 = vpop.f32.mrb[0].mxu0
    %v1402 = vadd.f32 %v1329, %v1401
    %v1403 = vpop.f32.mrb[0].mxu0
    %1404 = vdwg.mxu0
    %v1405 = vadd.f32 %v1402, %v222
    %v1406 = vxor.u32 %v1405, 2147483648
    %v1407 = vmul.f32 %v1406, 1.442695
    %v1408 = vpow.pop %v1407
    %v1409 = vadd.f32 %v1408, 1.0
    %v1410 = vrcp.pop %v1409
    %v1411 = vmul.f32 1.0, %v1410
    %v1412 = vtanh.pop %v1405
    %1414 = vrot.lane.b32.xlu0 %v1254, 32
    %v1415 = vpop.permute.xlu0 %1414
    %v1417 = vmul.f32 %v1411, %v1415
    %1419 = vrot.lane.b32.xlu0 %v1412, 32
    %v1420 = vpop.permute.xlu0 %1419
    %v1422 = vmul.f32 %v1411, %v1420
    %1424 = vrot.lane.b32.xlu0 %v1422, 32
    %v1425 = vpop.permute.xlu0 %1424
    %v1427 = vadd.f32 %v1417, %v1425
    %v1428 = vtanh.pop %v1427
    %1430 = vrot.lane.b32.xlu0 %v1428, 32
    %v1431 = vpop.permute.xlu0 %1430
    %v1433 = vmul.f32 %v1411, %v1431
    %s1434 = scalar_lea.vmem %s1, 12
    %v1435 = vld [vmem:[%s1434] sm:$0x3]
    %vm1436 = vcmp.ne.f32.partialorder %v1435, 0.0
    %v1437 = vsel %vm1436, 1, 0
    %1438 = vset.pattern.permute.xlu0 0
    %1439 = vperm.xlu0 %1438, %v1437
    %v1440 = vpop.permute.xlu0 %1439
    %vm1441 = vcmp.eq.s32.totalorder %v1440, 1
    %1443 = vrot.lane.b32.xlu0 %v1433, 64
    %v1444 = vpop.permute.xlu0 %1443
    %v1446 = vsel %vm1441, %v1249, %v1444
    %1448 = vrot.lane.b32.xlu0 %v1427, 96
    %v1449 = vpop.permute.xlu0 %1448
    %v1451 = vsel %vm1441, %v1254, %v1449
    %s1452 = scalar_lea.vmem [#allocation7], 12
    %1453 = vst.msk [vmem:[%s1452] sm:$0x3] %vm270, %v1446
    %s1454 = scalar_lea.vmem %s0, 14
    %v1455 = vld [vmem:[%s1454] sm:$0x3]
    %v1457 = vsel %vm71, %v1446, 0
    %1459 = vmatprep.subr.mxu0 0.0
    %1460 = vmatpush1.msra.mxu0 %v63
    %1461 = vmatprep.subr.mxu0 0.0
    %1462 = vmatpush1.msra.mxu0 %v64
    %1463 = vmatprep.subr.mxu0 0.0
    %1464 = vmatpush1.msra.mxu0 %v65
    %1465 = vmatprep.subr.mxu0 0.0
    %1466 = vmatpush1.msra.mxu0 %v66
    %1467 = vmatprep.subr.mxu0 0.0
    %1468 = vmatpush1.msra.mxu0 0.0
    %1469 = vmatprep.subr.mxu0 0.0
    %1470 = vmatpush1.msra.mxu0 0.0
    %1471 = vmatprep.subr.mxu0 0.0
    %1472 = vmatpush1.msra.mxu0 0.0
    %1473 = vmatprep.subr.mxu0 0.0
    %1474 = vmatpush1.msra.mxu0 0.0
    %1475 = vmatprep.subr.mxu0 0.0
    %1476 = vmatpush1.msra.mxu0 0.0
    %1477 = vmatprep.subr.mxu0 0.0
    %1478 = vmatpush1.msra.mxu0 0.0
    %1479 = vmatprep.subr.mxu0 0.0
    %1480 = vmatpush1.msra.mxu0 0.0
    %1481 = vmatprep.subr.mxu0 0.0
    %1482 = vmatpush1.msra.mxu0 0.0
    %1483 = vmatprep.subr.mxu0 0.0
    %1484 = vmatpush1.msra.mxu0 0.0
    %1485 = vmatprep.subr.mxu0 0.0
    %1486 = vmatpush1.msra.mxu0 0.0
    %1487 = vmatprep.subr.mxu0 0.0
    %1488 = vmatpush1.msra.mxu0 0.0
    %1489 = vmatprep.subr.mxu0 0.0
    %1490 = vmatpush1.msra.mxu0 0.0
    %1491 = vmatprep.subr.mxu0 0.0
    %1492 = vmatpush1.msra.mxu0 0.0
    %1493 = vmatprep.subr.mxu0 0.0
    %1494 = vmatpush1.msra.mxu0 0.0
    %1495 = vmatprep.subr.mxu0 0.0
    %1496 = vmatpush1.msra.mxu0 0.0
    %1497 = vmatprep.subr.mxu0 0.0
    %1498 = vmatpush1.msra.mxu0 0.0
    %1499 = vmatprep.subr.mxu0 0.0
    %1500 = vmatpush1.msra.mxu0 0.0
    %1501 = vmatprep.subr.mxu0 0.0
    %1502 = vmatpush1.msra.mxu0 0.0
    %1503 = vmatprep.subr.mxu0 0.0
    %1504 = vmatpush1.msra.mxu0 0.0
    %1505 = vmatprep.subr.mxu0 0.0
    %1506 = vmatpush1.msra.mxu0 0.0
    %1507 = vmatprep.subr.mxu0 0.0
    %1508 = vmatpush1.msra.mxu0 0.0
    %1509 = vmatprep.subr.mxu0 0.0
    %1510 = vmatpush1.msra.mxu0 0.0
    %1511 = vmatprep.subr.mxu0 0.0
    %1512 = vmatpush1.msra.mxu0 0.0
    %1513 = vmatprep.subr.mxu0 0.0
    %1514 = vmatpush1.msra.mxu0 0.0
    %1515 = vmatprep.subr.mxu0 0.0
    %1516 = vmatpush1.msra.mxu0 0.0
    %1517 = vmatprep.subr.mxu0 0.0
    %1518 = vmatpush1.msra.mxu0 0.0
    %1519 = vmatprep.subr.mxu0 0.0
    %1520 = vmatpush1.msra.mxu0 0.0
    %1521 = vmatprep.subr.mxu0 0.0
    %1522 = vmatpush1.msra.mxu0 0.0
    %1523 = vmatprep.mubr.f32.mxu0 0.0
    %1524 = vmatmul.mubr.f32.gmra.mrb[0].mxu0 %v1457
    %v1525 = vpop.f32.mrb[0].mxu0
    %v1526 = vadd.f32 0.0, %v1525
    %v1527 = vpop.f32.mrb[0].mxu0
    %1528 = vdwg.mxu0
    %v1530 = vsel %vm71, %v1455, 0
    %1532 = vmatprep.subr.mxu0 0.0
    %1533 = vmatpush1.msra.mxu0 %v59
    %1534 = vmatprep.subr.mxu0 0.0
    %1535 = vmatpush1.msra.mxu0 %v60
    %1536 = vmatprep.subr.mxu0 0.0
    %1537 = vmatpush1.msra.mxu0 %v61
    %1538 = vmatprep.subr.mxu0 0.0
    %1539 = vmatpush1.msra.mxu0 %v62
    %1540 = vmatprep.subr.mxu0 0.0
    %1541 = vmatpush1.msra.mxu0 0.0
    %1542 = vmatprep.subr.mxu0 0.0
    %1543 = vmatpush1.msra.mxu0 0.0
    %1544 = vmatprep.subr.mxu0 0.0
    %1545 = vmatpush1.msra.mxu0 0.0
    %1546 = vmatprep.subr.mxu0 0.0
    %1547 = vmatpush1.msra.mxu0 0.0
    %1548 = vmatprep.subr.mxu0 0.0
    %1549 = vmatpush1.msra.mxu0 0.0
    %1550 = vmatprep.subr.mxu0 0.0
    %1551 = vmatpush1.msra.mxu0 0.0
    %1552 = vmatprep.subr.mxu0 0.0
    %1553 = vmatpush1.msra.mxu0 0.0
    %1554 = vmatprep.subr.mxu0 0.0
    %1555 = vmatpush1.msra.mxu0 0.0
    %1556 = vmatprep.subr.mxu0 0.0
    %1557 = vmatpush1.msra.mxu0 0.0
    %1558 = vmatprep.subr.mxu0 0.0
    %1559 = vmatpush1.msra.mxu0 0.0
    %1560 = vmatprep.subr.mxu0 0.0
    %1561 = vmatpush1.msra.mxu0 0.0
    %1562 = vmatprep.subr.mxu0 0.0
    %1563 = vmatpush1.msra.mxu0 0.0
    %1564 = vmatprep.subr.mxu0 0.0
    %1565 = vmatpush1.msra.mxu0 0.0
    %1566 = vmatprep.subr.mxu0 0.0
    %1567 = vmatpush1.msra.mxu0 0.0
    %1568 = vmatprep.subr.mxu0 0.0
    %1569 = vmatpush1.msra.mxu0 0.0
    %1570 = vmatprep.subr.mxu0 0.0
    %1571 = vmatpush1.msra.mxu0 0.0
    %1572 = vmatprep.subr.mxu0 0.0
    %1573 = vmatpush1.msra.mxu0 0.0
    %1574 = vmatprep.subr.mxu0 0.0
    %1575 = vmatpush1.msra.mxu0 0.0
    %1576 = vmatprep.subr.mxu0 0.0
    %1577 = vmatpush1.msra.mxu0 0.0
    %1578 = vmatprep.subr.mxu0 0.0
    %1579 = vmatpush1.msra.mxu0 0.0
    %1580 = vmatprep.subr.mxu0 0.0
    %1581 = vmatpush1.msra.mxu0 0.0
    %1582 = vmatprep.subr.mxu0 0.0
    %1583 = vmatpush1.msra.mxu0 0.0
    %1584 = vmatprep.subr.mxu0 0.0
    %1585 = vmatpush1.msra.mxu0 0.0
    %1586 = vmatprep.subr.mxu0 0.0
    %1587 = vmatpush1.msra.mxu0 0.0
    %1588 = vmatprep.subr.mxu0 0.0
    %1589 = vmatpush1.msra.mxu0 0.0
    %1590 = vmatprep.subr.mxu0 0.0
    %1591 = vmatpush1.msra.mxu0 0.0
    %1592 = vmatprep.subr.mxu0 0.0
    %1593 = vmatpush1.msra.mxu0 0.0
    %1594 = vmatprep.subr.mxu0 0.0
    %1595 = vmatpush1.msra.mxu0 0.0
    %1596 = vmatprep.mubr.f32.mxu0 0.0
    %1597 = vmatmul.mubr.f32.gmra.mrb[0].mxu0 %v1530
    %v1598 = vpop.f32.mrb[0].mxu0
    %v1599 = vadd.f32 %v1526, %v1598
    %v1600 = vpop.f32.mrb[0].mxu0
    %1601 = vdwg.mxu0
    %v1602 = vadd.f32 %v1599, %v222
    %v1603 = vxor.u32 %v1602, 2147483648
    %v1604 = vmul.f32 %v1603, 1.442695
    %v1605 = vpow.pop %v1604
    %v1606 = vadd.f32 %v1605, 1.0
    %v1607 = vrcp.pop %v1606
    %v1608 = vmul.f32 1.0, %v1607
    %v1609 = vtanh.pop %v1602
    %1611 = vrot.lane.b32.xlu0 %v1451, 32
    %v1612 = vpop.permute.xlu0 %1611
    %v1614 = vmul.f32 %v1608, %v1612
    %1616 = vrot.lane.b32.xlu0 %v1609, 32
    %v1617 = vpop.permute.xlu0 %1616
    %v1619 = vmul.f32 %v1608, %v1617
    %1621 = vrot.lane.b32.xlu0 %v1619, 32
    %v1622 = vpop.permute.xlu0 %1621
    %v1624 = vadd.f32 %v1614, %v1622
    %v1625 = vtanh.pop %v1624
    %1627 = vrot.lane.b32.xlu0 %v1625, 32
    %v1628 = vpop.permute.xlu0 %1627
    %v1630 = vmul.f32 %v1608, %v1628
    %s1631 = scalar_lea.vmem %s1, 14
    %v1632 = vld [vmem:[%s1631] sm:$0x3]
    %vm1633 = vcmp.ne.f32.partialorder %v1632, 0.0
    %v1634 = vsel %vm1633, 1, 0
    %1635 = vset.pattern.permute.xlu0 0
    %1636 = vperm.xlu0 %1635, %v1634
    %v1637 = vpop.permute.xlu0 %1636
    %vm1638 = vcmp.eq.s32.totalorder %v1637, 1
    %1640 = vrot.lane.b32.xlu0 %v1630, 64
    %v1641 = vpop.permute.xlu0 %1640
    %v1643 = vsel %vm1638, %v1446, %v1641
    %1645 = vrot.lane.b32.xlu0 %v1624, 96
    %v1646 = vpop.permute.xlu0 %1645
    %v1648 = vsel %vm1638, %v1451, %v1646
    %s1649 = scalar_lea.vmem [#allocation7], 14
    %1650 = vst.msk [vmem:[%s1649] sm:$0x3] %vm270, %v1643
    %1651 = vst.msk [vmem:[#allocation8] sm:$0x3] %vm270, %v1643
    %1652 = vst.msk [vmem:[#allocation10] sm:$0x3] %vm270, %v1648
    // Predicated region
    $region38: #{tpu_custom_call.1} parent=1 // pred_check
      _
    $region39: #{tpu_custom_call.1} parent=1 // pred_check_branch
      %1654 = sbr.rel (0) target = $region41
    $region40: #{tpu_custom_call.1} parent=1 // pred_region
      %s1656 = ssub.s32 256, 256
      %1657 = vsyncadd [#allocation4], %s1656
      %s1658 = sshll.u32 [#allocation7], 4
      %s1659 = int_to_ptr.vmem [resolvable:$true] %s1658
      %1664 = dma.vmem_to_hbm [thread:$0]  %s1659, 256, %s7, [#allocation4], 32, 32, 2
    $region41: #{tpu_custom_call.1} parent=1 // pred_fallthru
      _
    // Predicated region
    $region42: #{tpu_custom_call.1} parent=1 // pred_check
      _
    $region43: #{tpu_custom_call.1} parent=1 // pred_check_branch
      %1666 = sbr.rel (0) target = $region45
    $region44: #{tpu_custom_call.1} parent=1 // pred_region
      %s1668 = ssub.s32 32, 32
      %1669 = vsyncadd [#allocation9], %s1668
      %s1671 = sshll.u32 [#allocation8], 4
      %s1672 = int_to_ptr.vmem [resolvable:$true] %s1671
      %1674 = dma.vmem_to_hbm [thread:$0]  %s1672, 32, %s8, [#allocation9]
    $region45: #{tpu_custom_call.1} parent=1 // pred_fallthru
      _
    // Predicated region
    $region46: #{tpu_custom_call.1} parent=1 // pred_check
      _
    $region47: #{tpu_custom_call.1} parent=1 // pred_check_branch
      %1676 = sbr.rel (0) target = $region49
    $region48: #{tpu_custom_call.1} parent=1 // pred_region
      %s1678 = ssub.s32 32, 32
      %1679 = vsyncadd [#allocation9], %s1678
      %s1681 = sshll.u32 [#allocation10], 4
      %s1682 = int_to_ptr.vmem [resolvable:$true] %s1681
      %1684 = dma.vmem_to_hbm [thread:$0]  %s1682, 32, %s9, [#allocation9]
    $region49: #{tpu_custom_call.1} parent=1 // pred_fallthru
      _
    // Predicated region
    $region50: #{tpu_custom_call.1} parent=1 // pred_check
      _
    $region51: #{tpu_custom_call.1} parent=1 // pred_check_branch
      %1686 = sbr.rel (0) target = $region53
    $region52: #{tpu_custom_call.1} parent=1 // pred_region
      %1687 = dma.done [#allocation4], 256
    $region53: #{tpu_custom_call.1} parent=1 // pred_fallthru
      _
    // Predicated region
    $region54: #{tpu_custom_call.1} parent=1 // pred_check
      _
    $region55: #{tpu_custom_call.1} parent=1 // pred_check_branch
      %1689 = sbr.rel (0) target = $region57
    $region56: #{tpu_custom_call.1} parent=1 // pred_region
      %1690 = dma.done [#allocation9], 32
    $region57: #{tpu_custom_call.1} parent=1 // pred_fallthru
      _
    // Predicated region
    $region58: #{tpu_custom_call.1} parent=1 // pred_check
      _
    $region59: #{tpu_custom_call.1} parent=1 // pred_check_branch
      %1692 = sbr.rel (0) target = $region61
    $region60: #{tpu_custom_call.1} parent=1 // pred_region
      %1693 = dma.done [#allocation9], 32
    $region61: #{tpu_custom_call.1} parent=1 // pred_fallthru
      _
    %1694 = vsyncpa [#allocation3], 1
    %1695 = vsyncpa [#allocation6], 1
    %1696 = vsyncpa [#allocation4], 1
    %1697 = vsyncpa [#allocation9], 1

</llo_original>
